<compile_context>
chip_gen: v7x
topology: tpu7x:2x2x1
jax: 0.10.0
libtpu: 0.0.40
codegen_flags: <defaults>
</compile_context>

<pallas_src>
import functools

import jax
import jax.numpy as jnp
from jax.experimental import pallas as pl
from jax.experimental.pallas import tpu as pltpu


_MIN_PALLAS_BATCH = 128    # below this the kernel is launch-overhead dominated
_LANE = 128


# ------------------------------ helpers ------------------------------------

def _round_up(x, m):
    return (x + m - 1) // m * m


def _pick_tile_b(b):
    """Batch tile: <=512 rows (~85% of HBM roofline already), and small enough
    that the grid has >=2 (ideally 4) steps for pipelining / v7x megacore."""
    b8 = _round_up(max(b, 8), 8)
    base = min(512, b8)
    cap = max(b8 // 4, 128)
    t = min(base, cap)
    return max((t // 8) * 8, 8)


# ----------------------------- Pallas kernel -------------------------------

def _mlp_fused_kernel(*refs, n_layers, use_relu):
    """Fused MLP over one batch tile.

    refs = (x_ref, w0, b0, w1, b1, ..., w_{L-1}, b_{L-1}, out_ref).
    Running activation stays in f32; weights may be bf16 (MXU operands);
    accumulation, bias add, ReLU and the final cast are f32.
    """
    x_ref, out_ref = refs[0], refs[-1]
    h = x_ref[...].astype(jnp.float32)
    for i in range(n_layers):
        w = refs[1 + 2 * i][...]
        b = refs[2 + 2 * i][...]
        lhs = h if w.dtype == jnp.float32 else h.astype(w.dtype)
        h = jnp.dot(lhs, w, preferred_element_type=jnp.float32)
        h = h + b.astype(jnp.float32)            # [1, F_out] broadcasts over rows
        if use_relu and i != n_layers - 1:
            h = jnp.maximum(h, 0.0)
    out_ref[...] = h.astype(out_ref.dtype)       # single cast, final layer only


# --------------------------- parameter preparation ---------------------------

def prepare_mlp_params(params, compute_dtype=None):
    """Pad / cast parameters ONCE at init time (not per forward call).

    params: list of (W [F_in, F_out], b [1, F_out] or [F_out]).
    Layer-0's K dim stays at the real inputN (x is fed unpadded); hidden
    widths are zero-padded to multiples of 128 (lane-dense intermediates);
    the final output width stays at the real M (minimal store bytes).
    compute_dtype: e.g. jnp.bfloat16 to feed the v6e/v7x MXU at bf16 peak
    (accumulation and epilogue stay f32 in the kernel).
    """
    n_layers = len(params)
    dims = [params[0][0].shape[0]] + [w.shape[1] for w, _ in params]
    flat = []
    for i, (w, b) in enumerate(params):
        fi, fo = dims[i], dims[i + 1]
        assert w.shape == (fi, fo)
        fi_p = fi if i == 0 else _round_up(fi, _LANE)
        fo_p = fo if i == n_layers - 1 else _round_up(fo, _LANE)
        w_dt = w.dtype if compute_dtype is None else compute_dtype
        w_pad = jnp.zeros((fi_p, fo_p), w_dt).at[:fi, :fo].set(w.astype(w_dt))
        b_pad = jnp.zeros((1, fo_p), jnp.float32).at[:, :fo].set(
            jnp.asarray(b, jnp.float32).reshape(1, -1))
        flat += [w_pad, b_pad]
    return {
        "flat": flat,
        "raw": [(w, b) for (w, b) in params],
        "dims": dims,
        "n_layers": n_layers,
        "input_n": dims[0],
        "output_m": dims[-1],
    }


# ----------------------------- VMEM budgeting --------------------------------

def _vmem_budget(flat, tile_b, in_n, out_m, x_itemsize, out_itemsize,
                 weight_buffers):
    """Derive vmem_limit_bytes from actual sizes; report whether whole-network
    weight residency fits under the physical VMEM of this chip."""
    weight_bytes = 0
    act_bytes = 0
    for j in range(0, len(flat), 2):
        w, b = flat[j], flat[j + 1]
        weight_bytes += weight_buffers * (w.size * w.dtype.itemsize
                                          + b.size * b.dtype.itemsize)
        act_bytes += tile_b * w.shape[1] * 4      # f32 intermediate per layer
    io_bytes = (2 * tile_b * in_n * x_itemsize    # double-buffered input tile
                + 2 * tile_b * out_m * out_itemsize)
    needed = weight_bytes + act_bytes + io_bytes
    try:
        phys = pltpu.get_tpu_info().vmem_capacity_bytes
    except Exception:
        phys = 64 << 20                           # most restrictive (v7x per-TC)
    cap = int(phys * 0.9)
    limit = min(max(2 * needed + (8 << 20), 32 << 20), cap)
    fits = (needed + (4 << 20)) <= cap
    return limit, fits


# ------------------------------ pallas_call ----------------------------------

def _pallas_forward(x_in, flat, n_layers, use_relu, tile_b, out_m,
                    vmem_limit, single_buffer_weights):
    b_pad, in_n = x_in.shape
    grid = (b_pad // tile_b,)

    wkw = {"pipeline_mode": pl.Buffered(1)} if single_buffer_weights else {}
    in_specs = [pl.BlockSpec((tile_b, in_n), lambda i: (i, 0))]
    for j in range(0, len(flat), 2):
        w, b = flat[j], flat[j + 1]
        # Weights/biases stay resident across the batch grid (constant index_map).
        in_specs.append(pl.BlockSpec(w.shape, lambda i: (0, 0), **wkw))
        in_specs.append(pl.BlockSpec(b.shape, lambda i: (0, 0), **wkw))
    out_spec = pl.BlockSpec((tile_b, out_m), lambda i: (i, 0))

    return pl.pallas_call(
        functools.partial(_mlp_fused_kernel, n_layers=n_layers,
                          use_relu=use_relu),
        out_shape=jax.ShapeDtypeStruct((b_pad, out_m), x_in.dtype),
        grid=grid,
        in_specs=in_specs,
        out_specs=out_spec,
        compiler_params=pltpu.CompilerParams(
            dimension_semantics=("parallel",),    # batch tiles shard over TCs (v7x)
            vmem_limit_bytes=vmem_limit,
        ),
    )(x_in, *flat)


# ----------------------------- model wrapper ---------------------------------

def _mlp_jax(x, raw_params, use_relu):
    """Plain fused-XLA chain (fallback path + correctness reference)."""
    n = len(raw_params)
    h = x
    for i, (w, b) in enumerate(raw_params):
        h = h @ w + jnp.reshape(b, (1, -1))
        if use_relu and i != n - 1:
            h = jnp.maximum(h, 0.0)
    return h


def mlp_single_stock_forward(x, prepared, use_relu, *, tile_b=None,
                             force_pallas=None):
    """Forward pass of MLPSingleStock.

    x: [B, inputN]; prepared: output of prepare_mlp_params().
    ReLU follows every Linear except the final one (matches the torch module).
    """
    B, N = x.shape
    assert N == prepared["input_n"], "input feature width mismatch"
    flat = prepared["flat"]
    n_layers = prepared["n_layers"]
    M = prepared["output_m"]

    use_pallas = (B >= _MIN_PALLAS_BATCH) if force_pallas is None else force_pallas

    if tile_b is None:
        tile_b = _pick_tile_b(B)
    tile_b = max(8, min((tile_b // 8) * 8, _round_up(B, 8)))
    B_pad = _round_up(B, tile_b)

    vmem_limit, fits = _vmem_budget(flat, tile_b, N, M,
                                    jnp.dtype(x.dtype).itemsize,
                                    jnp.dtype(x.dtype).itemsize,
                                    weight_buffers=1)
    if not fits:
        # TODO(synk): add a weight-chunked pltpu.emit_pipeline path for layers
        # too wide for whole-network VMEM residency (v7x, ~>1.5k-wide f32).
        use_pallas = False

    if not use_pallas:
        return _mlp_jax(x, prepared["raw"], use_relu)

    # Only the batch rows ever get padded (cheap); features stay unpadded.
    x_in = x if B_pad == B else jnp.zeros((B_pad, N), x.dtype).at[:B, :].set(x)

    try:
        out = _pallas_forward(x_in, flat, n_layers, use_relu, tile_b, M,
                              vmem_limit, single_buffer_weights=True)
    except Exception:
        # pl.Buffered(1) not supported by this jax/Mosaic version: retry with
        # default double-buffered (still grid-resident) weights.
        out = _pallas_forward(x_in, flat, n_layers, use_relu, tile_b, M,
                              vmem_limit, single_buffer_weights=False)

    return out if B_pad == B else out[:B]


# ----------------------------- init & reference ------------------------------

def init_mlp_params(key, input_n, hidden_widths, output_m, dtype=jnp.float32):
    """torch.nn.Linear-style U(-1/sqrt(fan_in), +1/sqrt(fan_in)) init.
    Weights stored [F_in, F_out] (transposed from torch) so the hot path is
    x @ W + b."""
    dims = [input_n] + list(hidden_widths) + [output_m]
    params = []
    for i in range(len(dims) - 1):
        fan_in, fan_out = dims[i], dims[i + 1]
        key, kw, kb = jax.random.split(key, 3)
        bound = 1.0 / float(fan_in) ** 0.5
        w = jax.random.uniform(kw, (fan_in, fan_out), dtype, -bound, bound)
        b = jax.random.uniform(kb, (1, fan_out), dtype, -bound, bound)
        params.append((w, b))
    return params


def mlp_reference(x, params, use_relu):
    return _mlp_jax(x, params, use_relu)


# --------------------------------- main --------------------------------------

if __name__ == "__main__":
    # Config analogous to MLPSingleStockConfig:
    #   inputOutput.inputN = 32, hiddenLayers = 2,
    #   hiddenLayerWidths = [64, 48], inputOutput.outputM = 16, useReLU = True
    INPUT_N = 32
    HIDDEN_WIDTHS = [64, 48]
    OUTPUT_M = 16
    USE_RELU = True
    BATCH = 256     # enough rows for the Pallas path (2 parallel 128-row tiles)

    key = jax.random.PRNGKey(0)
    key, kx = jax.random.split(key)
    x = jax.random.normal(kx, (BATCH, INPUT_N), jnp.float32)
    params = init_mlp_params(key, INPUT_N, HIDDEN_WIDTHS, OUTPUT_M)
    ref = mlp_reference(x, params, USE_RELU)

    # 1) f32 fused-kernel path (padding/casting hoisted to prepare_mlp_params).
    prep_f32 = prepare_mlp_params(params)
    out = jax.block_until_ready(mlp_single_stock_forward(x, prep_f32, USE_RELU))
    assert out.shape == (BATCH, OUTPUT_M)
    assert jnp.allclose(out, ref, atol=2e-5, rtol=1e-4), "Pallas f32 mismatch"

    # 2) bf16 weight storage (v6e/v7x MXU peak); f32 accumulation/epilogue.
    prep_bf16 = prepare_mlp_params(params, compute_dtype=jnp.bfloat16)
    out_bf16 = jax.block_until_ready(
        mlp_single_stock_forward(x, prep_bf16, USE_RELU))
    assert out_bf16.shape == (BATCH, OUTPUT_M)
    assert jnp.allclose(out_bf16, ref, atol=5e-2, rtol=5e-2), "Pallas bf16 mismatch"

    # 3) hiddenLayers == 0 branch of the torch module (single Linear, no ReLU).
    params0 = init_mlp_params(key, INPUT_N, [], OUTPUT_M)
    prep0 = prepare_mlp_params(params0)
    out0 = jax.block_until_ready(mlp_single_stock_forward(x, prep0, USE_RELU))
    ref0 = mlp_reference(x, params0, USE_RELU)
    assert jnp.allclose(out0, ref0, atol=2e-5, rtol=1e-4), "Pallas L=0 mismatch"

    # 4) Tiny batch: auto-gate routes to the plain-JAX fallback (the kernel is
    #    pure launch overhead at this size).
    x_small = x[:8]
    out_small = jax.block_until_ready(
        mlp_single_stock_forward(x_small, prep_f32, USE_RELU))
    assert jnp.allclose(out_small, mlp_reference(x_small, params, USE_RELU),
                        atol=2e-5, rtol=1e-4), "fallback mismatch"

    print("KERNEL_OK")
</pallas_src>

<mosaic_0001>
module attributes {stable_mosaic.version = 11 : i64} {
  func.func @_mlp_fused_kernel(%arg0: i32, %arg1: memref<128x32xf32, #tpu.memory_space<vmem>>, %arg2: memref<32x128xf32, #tpu.memory_space<vmem>>, %arg3: memref<1x128xf32, #tpu.memory_space<vmem>>, %arg4: memref<128x128xf32, #tpu.memory_space<vmem>>, %arg5: memref<1x128xf32, #tpu.memory_space<vmem>>, %arg6: memref<128x16xf32, #tpu.memory_space<vmem>>, %arg7: memref<1x16xf32, #tpu.memory_space<vmem>>, %arg8: memref<128x16xf32, #tpu.memory_space<vmem>>) attributes {dimension_semantics = [#tpu.dimension_semantics<parallel>], iteration_bounds = array<i64: 2>, scalar_prefetch = 0 : i64, scratch_operands = 0 : i64, tpu.core_type = #tpu.core_type<tc>, window_params = [{transform_indices = @transform_0, window_bounds = array<i64: 128, 32>}, {pipeline_mode = #tpu.pipeline_mode<synchronous>, transform_indices = @transform_1, window_bounds = array<i64: 32, 128>}, {pipeline_mode = #tpu.pipeline_mode<synchronous>, transform_indices = @transform_2, window_bounds = array<i64: 1, 128>}, {pipeline_mode = #tpu.pipeline_mode<synchronous>, transform_indices = @transform_3, window_bounds = array<i64: 128, 128>}, {pipeline_mode = #tpu.pipeline_mode<synchronous>, transform_indices = @transform_4, window_bounds = array<i64: 1, 128>}, {pipeline_mode = #tpu.pipeline_mode<synchronous>, transform_indices = @transform_5, window_bounds = array<i64: 128, 16>}, {pipeline_mode = #tpu.pipeline_mode<synchronous>, transform_indices = @transform_6, window_bounds = array<i64: 1, 16>}, {transform_indices = @transform_7, window_bounds = array<i64: 128, 16>}]} {
    %c0 = arith.constant 0 : index
    %c0_0 = arith.constant 0 : index
    %0 = vector.load %arg1[%c0, %c0_0] : memref<128x32xf32, #tpu.memory_space<vmem>>, vector<128x32xf32>
    %c0_1 = arith.constant 0 : index
    %c0_2 = arith.constant 0 : index
    %1 = vector.load %arg2[%c0_1, %c0_2] : memref<32x128xf32, #tpu.memory_space<vmem>>, vector<32x128xf32>
    %c0_3 = arith.constant 0 : index
    %c0_4 = arith.constant 0 : index
    %2 = vector.load %arg3[%c0_3, %c0_4] : memref<1x128xf32, #tpu.memory_space<vmem>>, vector<1x128xf32>
    %cst = arith.constant dense<0.000000e+00> : vector<128x128xf32>
    %3 = tpu.matmul %0, %1, %cst {dimension_numbers = #tpu.dot_dimension_numbers<[1], [0], [0], [1], [0, 0, 1, 1], [], []>} : vector<128x32xf32>, vector<32x128xf32>, vector<128x128xf32> -> vector<128x128xf32>
    %4 = vector.broadcast %2 : vector<1x128xf32> to vector<128x128xf32>
    %5 = arith.addf %3, %4 : vector<128x128xf32>
    %cst_5 = arith.constant 0.000000e+00 : f32
    %6 = vector.broadcast %cst_5 : f32 to vector<128x128xf32>
    %7 = arith.maximumf %5, %6 : vector<128x128xf32>
    %c0_6 = arith.constant 0 : index
    %c0_7 = arith.constant 0 : index
    %8 = vector.load %arg4[%c0_6, %c0_7] : memref<128x128xf32, #tpu.memory_space<vmem>>, vector<128x128xf32>
    %c0_8 = arith.constant 0 : index
    %c0_9 = arith.constant 0 : index
    %9 = vector.load %arg5[%c0_8, %c0_9] : memref<1x128xf32, #tpu.memory_space<vmem>>, vector<1x128xf32>
    %cst_10 = arith.constant dense<0.000000e+00> : vector<128x128xf32>
    %10 = tpu.matmul %7, %8, %cst_10 {dimension_numbers = #tpu.dot_dimension_numbers<[1], [0], [0], [1], [0, 0, 1, 1], [], []>} : vector<128x128xf32>, vector<128x128xf32>, vector<128x128xf32> -> vector<128x128xf32>
    %11 = vector.broadcast %9 : vector<1x128xf32> to vector<128x128xf32>
    %12 = arith.addf %10, %11 : vector<128x128xf32>
    %cst_11 = arith.constant 0.000000e+00 : f32
    %13 = vector.broadcast %cst_11 : f32 to vector<128x128xf32>
    %14 = arith.maximumf %12, %13 : vector<128x128xf32>
    %c0_12 = arith.constant 0 : index
    %c0_13 = arith.constant 0 : index
    %15 = vector.load %arg6[%c0_12, %c0_13] : memref<128x16xf32, #tpu.memory_space<vmem>>, vector<128x16xf32>
    %c0_14 = arith.constant 0 : index
    %c0_15 = arith.constant 0 : index
    %16 = vector.load %arg7[%c0_14, %c0_15] : memref<1x16xf32, #tpu.memory_space<vmem>>, vector<1x16xf32>
    %cst_16 = arith.constant dense<0.000000e+00> : vector<128x16xf32>
    %17 = tpu.matmul %14, %15, %cst_16 {dimension_numbers = #tpu.dot_dimension_numbers<[1], [0], [0], [1], [0, 0, 1, 1], [], []>} : vector<128x128xf32>, vector<128x16xf32>, vector<128x16xf32> -> vector<128x16xf32>
    %18 = vector.broadcast %16 : vector<1x16xf32> to vector<128x16xf32>
    %19 = arith.addf %17, %18 : vector<128x16xf32>
    %c0_17 = arith.constant 0 : index
    %c0_18 = arith.constant 0 : index
    %20 = vector.load %arg8[%c0_17, %c0_18] : memref<128x16xf32, #tpu.memory_space<vmem>>, vector<128x16xf32>
    tpu.vector_store %arg8[%c0_17, %c0_18], %19 {strides = array<i32>} : memref<128x16xf32, #tpu.memory_space<vmem>>, vector<128x16xf32>,
    return
  }
  func.func @transform_0(%arg0: i32) -> (i32, i32) {
    %c0_i32 = arith.constant 0 : i32
    %c0_i32_0 = arith.constant 0 : i32
    return %arg0, %c0_i32 : i32, i32
  }
  func.func @transform_1(%arg0: i32) -> (i32, i32) {
    %c0_i32 = arith.constant 0 : i32
    %c0_i32_0 = arith.constant 0 : i32
    %c0_i32_1 = arith.constant 0 : i32
    return %c0_i32, %c0_i32_0 : i32, i32
  }
  func.func @transform_2(%arg0: i32) -> (i32, i32) {
    %c0_i32 = arith.constant 0 : i32
    %c0_i32_0 = arith.constant 0 : i32
    %c0_i32_1 = arith.constant 0 : i32
    return %c0_i32, %c0_i32_0 : i32, i32
  }
  func.func @transform_3(%arg0: i32) -> (i32, i32) {
    %c0_i32 = arith.constant 0 : i32
    %c0_i32_0 = arith.constant 0 : i32
    %c0_i32_1 = arith.constant 0 : i32
    return %c0_i32, %c0_i32_0 : i32, i32
  }
  func.func @transform_4(%arg0: i32) -> (i32, i32) {
    %c0_i32 = arith.constant 0 : i32
    %c0_i32_0 = arith.constant 0 : i32
    %c0_i32_1 = arith.constant 0 : i32
    return %c0_i32, %c0_i32_0 : i32, i32
  }
  func.func @transform_5(%arg0: i32) -> (i32, i32) {
    %c0_i32 = arith.constant 0 : i32
    %c0_i32_0 = arith.constant 0 : i32
    %c0_i32_1 = arith.constant 0 : i32
    return %c0_i32, %c0_i32_0 : i32, i32
  }
  func.func @transform_6(%arg0: i32) -> (i32, i32) {
    %c0_i32 = arith.constant 0 : i32
    %c0_i32_0 = arith.constant 0 : i32
    %c0_i32_1 = arith.constant 0 : i32
    return %c0_i32, %c0_i32_0 : i32, i32
  }
  func.func @transform_7(%arg0: i32) -> (i32, i32) {
    %c0_i32 = arith.constant 0 : i32
    %c0_i32_0 = arith.constant 0 : i32
    return %arg0, %c0_i32 : i32, i32
  }
}

module attributes {stable_mosaic.version = 11 : i64} {
  func.func @_mlp_fused_kernel(%arg0: i32, %arg1: memref<128x32xf32, #tpu.memory_space<vmem>>, %arg2: memref<32x128xf32, #tpu.memory_space<vmem>>, %arg3: memref<1x128xf32, #tpu.memory_space<vmem>>, %arg4: memref<128x128xf32, #tpu.memory_space<vmem>>, %arg5: memref<1x128xf32, #tpu.memory_space<vmem>>, %arg6: memref<128x16xf32, #tpu.memory_space<vmem>>, %arg7: memref<1x16xf32, #tpu.memory_space<vmem>>, %arg8: memref<128x16xf32, #tpu.memory_space<vmem>>) attributes {dimension_semantics = [#tpu.dimension_semantics<parallel>], iteration_bounds = array<i64: 2>, scalar_prefetch = 0 : i64, scratch_operands = 0 : i64, tpu.core_type = #tpu.core_type<tc>, window_params = [{transform_indices = @transform_0, window_bounds = array<i64: 128, 32>}, {pipeline_mode = #tpu.pipeline_mode<synchronous>, transform_indices = @transform_1, window_bounds = array<i64: 32, 128>}, {pipeline_mode = #tpu.pipeline_mode<synchronous>, transform_indices = @transform_2, window_bounds = array<i64: 1, 128>}, {pipeline_mode = #tpu.pipeline_mode<synchronous>, transform_indices = @transform_3, window_bounds = array<i64: 128, 128>}, {pipeline_mode = #tpu.pipeline_mode<synchronous>, transform_indices = @transform_4, window_bounds = array<i64: 1, 128>}, {pipeline_mode = #tpu.pipeline_mode<synchronous>, transform_indices = @transform_5, window_bounds = array<i64: 128, 16>}, {pipeline_mode = #tpu.pipeline_mode<synchronous>, transform_indices = @transform_6, window_bounds = array<i64: 1, 16>}, {transform_indices = @transform_7, window_bounds = array<i64: 128, 16>}]} {
    %c0 = arith.constant 0 : index
    %c0_0 = arith.constant 0 : index
    %0 = vector.load %arg1[%c0, %c0_0] : memref<128x32xf32, #tpu.memory_space<vmem>>, vector<128x32xf32>
    %c0_1 = arith.constant 0 : index
    %c0_2 = arith.constant 0 : index
    %1 = vector.load %arg2[%c0_1, %c0_2] : memref<32x128xf32, #tpu.memory_space<vmem>>, vector<32x128xf32>
    %c0_3 = arith.constant 0 : index
    %c0_4 = arith.constant 0 : index
    %2 = vector.load %arg3[%c0_3, %c0_4] : memref<1x128xf32, #tpu.memory_space<vmem>>, vector<1x128xf32>
    %cst = arith.constant dense<0.000000e+00> : vector<128x128xf32>
    %3 = tpu.matmul %0, %1, %cst {dimension_numbers = #tpu.dot_dimension_numbers<[1], [0], [0], [1], [0, 0, 1, 1], [], []>} : vector<128x32xf32>, vector<32x128xf32>, vector<128x128xf32> -> vector<128x128xf32>
    %4 = vector.broadcast %2 : vector<1x128xf32> to vector<128x128xf32>
    %5 = arith.addf %3, %4 : vector<128x128xf32>
    %cst_5 = arith.constant 0.000000e+00 : f32
    %6 = vector.broadcast %cst_5 : f32 to vector<128x128xf32>
    %7 = arith.maximumf %5, %6 : vector<128x128xf32>
    %c0_6 = arith.constant 0 : index
    %c0_7 = arith.constant 0 : index
    %8 = vector.load %arg4[%c0_6, %c0_7] : memref<128x128xf32, #tpu.memory_space<vmem>>, vector<128x128xf32>
    %c0_8 = arith.constant 0 : index
    %c0_9 = arith.constant 0 : index
    %9 = vector.load %arg5[%c0_8, %c0_9] : memref<1x128xf32, #tpu.memory_space<vmem>>, vector<1x128xf32>
    %cst_10 = arith.constant dense<0.000000e+00> : vector<128x128xf32>
    %10 = tpu.matmul %7, %8, %cst_10 {dimension_numbers = #tpu.dot_dimension_numbers<[1], [0], [0], [1], [0, 0, 1, 1], [], []>} : vector<128x128xf32>, vector<128x128xf32>, vector<128x128xf32> -> vector<128x128xf32>
    %11 = vector.broadcast %9 : vector<1x128xf32> to vector<128x128xf32>
    %12 = arith.addf %10, %11 : vector<128x128xf32>
    %cst_11 = arith.constant 0.000000e+00 : f32
    %13 = vector.broadcast %cst_11 : f32 to vector<128x128xf32>
    %14 = arith.maximumf %12, %13 : vector<128x128xf32>
    %c0_12 = arith.constant 0 : index
    %c0_13 = arith.constant 0 : index
    %15 = vector.load %arg6[%c0_12, %c0_13] : memref<128x16xf32, #tpu.memory_space<vmem>>, vector<128x16xf32>
    %c0_14 = arith.constant 0 : index
    %c0_15 = arith.constant 0 : index
    %16 = vector.load %arg7[%c0_14, %c0_15] : memref<1x16xf32, #tpu.memory_space<vmem>>, vector<1x16xf32>
    %cst_16 = arith.constant dense<0.000000e+00> : vector<128x16xf32>
    %17 = tpu.matmul %14, %15, %cst_16 {dimension_numbers = #tpu.dot_dimension_numbers<[1], [0], [0], [1], [0, 0, 1, 1], [], []>} : vector<128x128xf32>, vector<128x16xf32>, vector<128x16xf32> -> vector<128x16xf32>
    %18 = vector.broadcast %16 : vector<1x16xf32> to vector<128x16xf32>
    %19 = arith.addf %17, %18 : vector<128x16xf32>
    %c0_17 = arith.constant 0 : index
    %c0_18 = arith.constant 0 : index
    %20 = vector.load %arg8[%c0_17, %c0_18] : memref<128x16xf32, #tpu.memory_space<vmem>>, vector<128x16xf32>
    tpu.vector_store %arg8[%c0_17, %c0_18], %19 {strides = array<i32>} : memref<128x16xf32, #tpu.memory_space<vmem>>, vector<128x16xf32>,
    return
  }
  func.func @transform_0(%arg0: i32) -> (i32, i32) {
    %c0_i32 = arith.constant 0 : i32
    %c0_i32_0 = arith.constant 0 : i32
    return %arg0, %c0_i32 : i32, i32
  }
  func.func @transform_1(%arg0: i32) -> (i32, i32) {
    %c0_i32 = arith.constant 0 : i32
    %c0_i32_0 = arith.constant 0 : i32
    %c0_i32_1 = arith.constant 0 : i32
    return %c0_i32, %c0_i32_0 : i32, i32
  }
  func.func @transform_2(%arg0: i32) -> (i32, i32) {
    %c0_i32 = arith.constant 0 : i32
    %c0_i32_0 = arith.constant 0 : i32
    %c0_i32_1 = arith.constant 0 : i32
    return %c0_i32, %c0_i32_0 : i32, i32
  }
  func.func @transform_3(%arg0: i32) -> (i32, i32) {
    %c0_i32 = arith.constant 0 : i32
    %c0_i32_0 = arith.constant 0 : i32
    %c0_i32_1 = arith.constant 0 : i32
    return %c0_i32, %c0_i32_0 : i32, i32
  }
  func.func @transform_4(%arg0: i32) -> (i32, i32) {
    %c0_i32 = arith.constant 0 : i32
    %c0_i32_0 = arith.constant 0 : i32
    %c0_i32_1 = arith.constant 0 : i32
    return %c0_i32, %c0_i32_0 : i32, i32
  }
  func.func @transform_5(%arg0: i32) -> (i32, i32) {
    %c0_i32 = arith.constant 0 : i32
    %c0_i32_0 = arith.constant 0 : i32
    %c0_i32_1 = arith.constant 0 : i32
    return %c0_i32, %c0_i32_0 : i32, i32
  }
  func.func @transform_6(%arg0: i32) -> (i32, i32) {
    %c0_i32 = arith.constant 0 : i32
    %c0_i32_0 = arith.constant 0 : i32
    %c0_i32_1 = arith.constant 0 : i32
    return %c0_i32, %c0_i32_0 : i32, i32
  }
  func.func @transform_7(%arg0: i32) -> (i32, i32) {
    %c0_i32 = arith.constant 0 : i32
    %c0_i32_0 = arith.constant 0 : i32
    return %arg0, %c0_i32 : i32, i32
  }
}

</mosaic_0001>

<llo_original>
// kernel: tpu_custom_call.1
$region0: #{tpu_custom_call.1}
  #allocation0 [shape = 'u32[]', space=smem, size = 0x4, offset = 0x4, fixed_abs, tag = 'smem constant byte address 0x4 - core index']
  #allocation1 [shape = 'u32[144,128]{1,0:T(1,128)}', space=vmem, size = 0x12000, scoped, tag = 'internal scratch']
  %s0 = inlined_call_operand.vmem [shape: f32[256,32], index: 0, kind: input, shape index: {}]
  %s1 = inlined_call_operand.vmem [shape: f32[32,128], index: 1, kind: input, shape index: {}]
  %s2 = inlined_call_operand.vmem [shape: f32[1,128], index: 2, kind: input, shape index: {}]
  %s3 = inlined_call_operand.vmem [shape: f32[128,128], index: 3, kind: input, shape index: {}]
  %s4 = inlined_call_operand.vmem [shape: f32[1,128], index: 4, kind: input, shape index: {}]
  %s5 = inlined_call_operand.vmem [shape: f32[128,16], index: 5, kind: input, shape index: {}]
  %s6 = inlined_call_operand.vmem [shape: f32[1,16], index: 6, kind: input, shape index: {}]
  %s7 = inlined_call_operand.vmem [shape: f32[256,16], index: 7, kind: output, shape index: {}]
  %s8 = sld [smem:[#allocation0]]
  $region61: #{tpu_custom_call.1} parent=0
    _
  %s10 = ssub.s32 1, %s8
  %s11 = scalar_select 0, %s10, %s8
  loop: start=0, step=1, limit=4
  $region2: #{tpu_custom_call.1} parent=0 // loop_pre_header
    _
  $region3: #{tpu_custom_call.1} parent=0 // loop_header
    %s13 = sphi 0, %s17
    %p14 = scmp.ge.s32.totalorder %s13, 4
    %s23 = sphi 0, %s25
    %s26 = sphi 0, %s23
    %s27 = sphi 0, %s26
    %s43 = sphi 0, %s27
    %s47 = sphi 0, %s47
    %s49 = sphi 0, %s47
    %s50 = sphi 0, %s49
    %s64 = sphi 0, %s50
    %s68 = sphi 0, %s68
    %s70 = sphi 0, %s68
    %s71 = sphi 0, %s70
    %s85 = sphi 0, %s71
    %s89 = sphi 0, %s89
    %s91 = sphi 0, %s89
    %s92 = sphi 0, %s91
    %s106 = sphi 0, %s92
    %s110 = sphi 0, %s110
    %s112 = sphi 0, %s110
    %s113 = sphi 0, %s112
    %s127 = sphi 0, %s113
    %s131 = sphi 0, %s131
    %s133 = sphi 0, %s131
    %s134 = sphi 0, %s133
    %s148 = sphi 0, %s134
    %s152 = sphi 0, %s152
    %s154 = sphi 0, %s152
    %s155 = sphi 0, %s154
    %s169 = sphi 0, %s155
    %s175 = sphi 0, %s177
    %s178 = sphi 0, %s175
    %s179 = sphi 0, %s178
    %s195 = sphi 0, %s179
  $region4: #{tpu_custom_call.1} parent=0 // loop_header_branch
    %16 = sbr.rel (%p14) target = $region8
  $region5: #{tpu_custom_call.1} parent=0 // loop_body
    %s18 = ssub.s32 %s13, 1
    %s19 = ssub.s32 %s13, 2
    %s20 = sadd.s32 %s13, 1
    %s21 = ssub.s32 %s13, %s20
    %p22 = scmp.eq.s32.totalorder %s21, 0
    %s24 = sadd.s32 %s23, 1
    %s25 = scalar_select %p22, %s23, %s24
    %p28 = pneg %p22
    %p29 = scmp.eq.s32.totalorder %s13, 1
    %p30 = por %p28, %p29
    %p31 = scmp.ne.s32.totalorder %s23, %s26
    %p32 = scmp.eq.s32.totalorder %s13, 0
    %p33 = por %p31, %p32
    %p34 = scmp.ne.s32.totalorder %s23, %s26
    %p35 = scmp.eq.s32.totalorder %s18, 1
    %p36 = por %p34, %p35
    %p37 = scmp.ne.s32.totalorder %s26, %s27
    %p38 = scmp.eq.s32.totalorder %s18, 0
    %p39 = por %p37, %p38
    %p40 = scmp.ne.s32.totalorder %s26, %s27
    %p41 = scmp.eq.s32.totalorder %s19, 1
    %p42 = por %p40, %p41
    %p44 = scmp.ne.s32.totalorder %s27, %s43
    %p45 = scmp.eq.s32.totalorder %s19, 0
    %p46 = por %p44, %p45
    %s48 = sadd.s32 %s47, 1
    %p51 = scmp.eq.s32.totalorder %s13, 1
    %p52 = scmp.ne.s32.totalorder %s47, %s49
    %p53 = scmp.eq.s32.totalorder %s13, 0
    %p54 = por %p52, %p53
    %p55 = scmp.ne.s32.totalorder %s47, %s49
    %p56 = scmp.eq.s32.totalorder %s18, 1
    %p57 = por %p55, %p56
    %p58 = scmp.ne.s32.totalorder %s49, %s50
    %p59 = scmp.eq.s32.totalorder %s18, 0
    %p60 = por %p58, %p59
    %p61 = scmp.ne.s32.totalorder %s49, %s50
    %p62 = scmp.eq.s32.totalorder %s19, 1
    %p63 = por %p61, %p62
    %p65 = scmp.ne.s32.totalorder %s50, %s64
    %p66 = scmp.eq.s32.totalorder %s19, 0
    %p67 = por %p65, %p66
    %s69 = sadd.s32 %s68, 1
    %p72 = scmp.eq.s32.totalorder %s13, 1
    %p73 = scmp.ne.s32.totalorder %s68, %s70
    %p74 = scmp.eq.s32.totalorder %s13, 0
    %p75 = por %p73, %p74
    %p76 = scmp.ne.s32.totalorder %s68, %s70
    %p77 = scmp.eq.s32.totalorder %s18, 1
    %p78 = por %p76, %p77
    %p79 = scmp.ne.s32.totalorder %s70, %s71
    %p80 = scmp.eq.s32.totalorder %s18, 0
    %p81 = por %p79, %p80
    %p82 = scmp.ne.s32.totalorder %s70, %s71
    %p83 = scmp.eq.s32.totalorder %s19, 1
    %p84 = por %p82, %p83
    %p86 = scmp.ne.s32.totalorder %s71, %s85
    %p87 = scmp.eq.s32.totalorder %s19, 0
    %p88 = por %p86, %p87
    %s90 = sadd.s32 %s89, 1
    %p93 = scmp.eq.s32.totalorder %s13, 1
    %p94 = scmp.ne.s32.totalorder %s89, %s91
    %p95 = scmp.eq.s32.totalorder %s13, 0
    %p96 = por %p94, %p95
    %p97 = scmp.ne.s32.totalorder %s89, %s91
    %p98 = scmp.eq.s32.totalorder %s18, 1
    %p99 = por %p97, %p98
    %p100 = scmp.ne.s32.totalorder %s91, %s92
    %p101 = scmp.eq.s32.totalorder %s18, 0
    %p102 = por %p100, %p101
    %p103 = scmp.ne.s32.totalorder %s91, %s92
    %p104 = scmp.eq.s32.totalorder %s19, 1
    %p105 = por %p103, %p104
    %p107 = scmp.ne.s32.totalorder %s92, %s106
    %p108 = scmp.eq.s32.totalorder %s19, 0
    %p109 = por %p107, %p108
    %s111 = sadd.s32 %s110, 1
    %p114 = scmp.eq.s32.totalorder %s13, 1
    %p115 = scmp.ne.s32.totalorder %s110, %s112
    %p116 = scmp.eq.s32.totalorder %s13, 0
    %p117 = por %p115, %p116
    %p118 = scmp.ne.s32.totalorder %s110, %s112
    %p119 = scmp.eq.s32.totalorder %s18, 1
    %p120 = por %p118, %p119
    %p121 = scmp.ne.s32.totalorder %s112, %s113
    %p122 = scmp.eq.s32.totalorder %s18, 0
    %p123 = por %p121, %p122
    %p124 = scmp.ne.s32.totalorder %s112, %s113
    %p125 = scmp.eq.s32.totalorder %s19, 1
    %p126 = por %p124, %p125
    %p128 = scmp.ne.s32.totalorder %s113, %s127
    %p129 = scmp.eq.s32.totalorder %s19, 0
    %p130 = por %p128, %p129
    %s132 = sadd.s32 %s131, 1
    %p135 = scmp.eq.s32.totalorder %s13, 1
    %p136 = scmp.ne.s32.totalorder %s131, %s133
    %p137 = scmp.eq.s32.totalorder %s13, 0
    %p138 = por %p136, %p137
    %p139 = scmp.ne.s32.totalorder %s131, %s133
    %p140 = scmp.eq.s32.totalorder %s18, 1
    %p141 = por %p139, %p140
    %p142 = scmp.ne.s32.totalorder %s133, %s134
    %p143 = scmp.eq.s32.totalorder %s18, 0
    %p144 = por %p142, %p143
    %p145 = scmp.ne.s32.totalorder %s133, %s134
    %p146 = scmp.eq.s32.totalorder %s19, 1
    %p147 = por %p145, %p146
    %p149 = scmp.ne.s32.totalorder %s134, %s148
    %p150 = scmp.eq.s32.totalorder %s19, 0
    %p151 = por %p149, %p150
    %s153 = sadd.s32 %s152, 1
    %p156 = scmp.eq.s32.totalorder %s13, 1
    %p157 = scmp.ne.s32.totalorder %s152, %s154
    %p158 = scmp.eq.s32.totalorder %s13, 0
    %p159 = por %p157, %p158
    %p160 = scmp.ne.s32.totalorder %s152, %s154
    %p161 = scmp.eq.s32.totalorder %s18, 1
    %p162 = por %p160, %p161
    %p163 = scmp.ne.s32.totalorder %s154, %s155
    %p164 = scmp.eq.s32.totalorder %s18, 0
    %p165 = por %p163, %p164
    %p166 = scmp.ne.s32.totalorder %s154, %s155
    %p167 = scmp.eq.s32.totalorder %s19, 1
    %p168 = por %p166, %p167
    %p170 = scmp.ne.s32.totalorder %s155, %s169
    %p171 = scmp.eq.s32.totalorder %s19, 0
    %p172 = por %p170, %p171
    %s173 = ssub.s32 %s13, %s20
    %p174 = scmp.eq.s32.totalorder %s173, 0
    %s176 = sadd.s32 %s175, 1
    %s177 = scalar_select %p174, %s175, %s176
    %p180 = pneg %p174
    %p181 = scmp.eq.s32.totalorder %s13, 1
    %p182 = por %p180, %p181
    %p183 = scmp.ne.s32.totalorder %s175, %s178
    %p184 = scmp.eq.s32.totalorder %s13, 0
    %p185 = por %p183, %p184
    %p186 = scmp.ne.s32.totalorder %s175, %s178
    %p187 = scmp.eq.s32.totalorder %s18, 1
    %p188 = por %p186, %p187
    %p189 = scmp.ne.s32.totalorder %s178, %s179
    %p190 = scmp.eq.s32.totalorder %s18, 0
    %p191 = por %p189, %p190
    %p192 = scmp.ne.s32.totalorder %s178, %s179
    %p193 = scmp.eq.s32.totalorder %s19, 1
    %p194 = por %p192, %p193
    %p196 = scmp.ne.s32.totalorder %s179, %s195
    %p197 = scmp.eq.s32.totalorder %s19, 0
    %p198 = por %p196, %p197
    %p199 = scmp.le.s32.totalorder 1, %s13
    %p200 = scmp.lt.s32.totalorder %s13, 3
    %p201 = pnand %p199, %p200
    %p202 = pneg %p201
    // Predicated region
    $region9: #{tpu_custom_call.1} parent=5 // pred_check
      _
    $region10: #{tpu_custom_call.1} parent=5 // pred_check_branch
      %204 = sbr.rel (%p201) target = $region12
    $region11: #{tpu_custom_call.1} parent=5 // pred_region
      %s205 = ssub.s32 %s13, 1
      // Predicated region
      $region13: #{tpu_custom_call.1} parent=11 // pred_check
        %p206 = pneg %p60
      $region14: #{tpu_custom_call.1} parent=11 // pred_check_branch
        %208 = sbr.rel (%p206) target = $region16
      $region15: #{tpu_custom_call.1} parent=11 // pred_region
        _
      $region16: #{tpu_custom_call.1} parent=11 // pred_fallthru
        _
      // Predicated region
      $region17: #{tpu_custom_call.1} parent=11 // pred_check
        %p209 = pneg %p81
      $region18: #{tpu_custom_call.1} parent=11 // pred_check_branch
        %211 = sbr.rel (%p209) target = $region20
      $region19: #{tpu_custom_call.1} parent=11 // pred_region
        _
      $region20: #{tpu_custom_call.1} parent=11 // pred_fallthru
        _
      // Predicated region
      $region21: #{tpu_custom_call.1} parent=11 // pred_check
        %p212 = pneg %p102
      $region22: #{tpu_custom_call.1} parent=11 // pred_check_branch
        %214 = sbr.rel (%p212) target = $region24
      $region23: #{tpu_custom_call.1} parent=11 // pred_region
        _
      $region24: #{tpu_custom_call.1} parent=11 // pred_fallthru
        _
      // Predicated region
      $region25: #{tpu_custom_call.1} parent=11 // pred_check
        %p215 = pneg %p123
      $region26: #{tpu_custom_call.1} parent=11 // pred_check_branch
        %217 = sbr.rel (%p215) target = $region28
      $region27: #{tpu_custom_call.1} parent=11 // pred_region
        _
      $region28: #{tpu_custom_call.1} parent=11 // pred_fallthru
        _
      // Predicated region
      $region29: #{tpu_custom_call.1} parent=11 // pred_check
        %p218 = pneg %p144
      $region30: #{tpu_custom_call.1} parent=11 // pred_check_branch
        %220 = sbr.rel (%p218) target = $region32
      $region31: #{tpu_custom_call.1} parent=11 // pred_region
        _
      $region32: #{tpu_custom_call.1} parent=11 // pred_fallthru
        _
      // Predicated region
      $region33: #{tpu_custom_call.1} parent=11 // pred_check
        %p221 = pneg %p165
      $region34: #{tpu_custom_call.1} parent=11 // pred_check_branch
        %223 = sbr.rel (%p221) target = $region36
      $region35: #{tpu_custom_call.1} parent=11 // pred_region
        _
      $region36: #{tpu_custom_call.1} parent=11 // pred_fallthru
        _
    $region12: #{tpu_custom_call.1} parent=5 // pred_fallthru
      _
    %p224 = scmp.lt.s32.totalorder %s13, 2
    // Predicated region
    $region37: #{tpu_custom_call.1} parent=5 // pred_check
      %p225 = pneg %p224
    $region38: #{tpu_custom_call.1} parent=5 // pred_check_branch
      %227 = sbr.rel (%p225) target = $region40
    $region39: #{tpu_custom_call.1} parent=5 // pred_region
      // Predicated region
      $region41: #{tpu_custom_call.1} parent=39 // pred_check
        %p228 = pneg %p33
      $region42: #{tpu_custom_call.1} parent=39 // pred_check_branch
        %230 = sbr.rel (%p228) target = $region44
      $region43: #{tpu_custom_call.1} parent=39 // pred_region
        %s231 = smul.u32 16, %s13
        %p232 = scmp.lt.s32.totalorder %s231, 31
        %s233 = scalar_select %p232, %s231, 31
        %s234 = smul.addr %s233, 8
        %s235 = scalar_lea.vmem %s0, %s234
        %s236 = smul.u32 16, %s13
      $region44: #{tpu_custom_call.1} parent=39 // pred_fallthru
        _
    $region40: #{tpu_custom_call.1} parent=5 // pred_fallthru
      _
    %p237 = scmp.le.s32.totalorder 1, %s13
    %p238 = scmp.lt.s32.totalorder %s13, 3
    %p239 = pnand %p237, %p238
    %p240 = pneg %p239
    // Predicated region
    $region45: #{tpu_custom_call.1} parent=5 // pred_check
      _
    $region46: #{tpu_custom_call.1} parent=5 // pred_check_branch
      %242 = sbr.rel (%p239) target = $region48
    $region47: #{tpu_custom_call.1} parent=5 // pred_region
      %s243 = ssub.s32 %s13, 1
      %s244 = smul.u32 16, %s18
      %p245 = scmp.lt.s32.totalorder %s244, 31
      %s246 = scalar_select %p245, %s244, 31
      %s247 = smul.addr %s246, 8
      %s248 = scalar_lea.vmem %s0, %s247
      %p249 = pneg %p39
      %p250 = pneg %p36
      %p251 = pneg %p60
      %p252 = pneg %p57
      %p253 = pneg %p81
      %p254 = pneg %p78
      %p255 = pneg %p102
      %p256 = pneg %p99
      %p257 = pneg %p123
      %p258 = pneg %p120
      %p259 = pneg %p144
      %p260 = pneg %p141
      %p261 = pneg %p165
      %p262 = pneg %p162
      %p263 = pneg %p191
      %p264 = pneg %p188
      %s265 = smul.u32 16, %s18
      %p266 = scmp.lt.s32.totalorder %s265, 31
      %s267 = scalar_select %p266, %s265, 31
      %s268 = smul.addr %s267, 8
      %s269 = scalar_lea.vmem %s7, %s268
      %s270 = smul.u32 16, %s18
      %p271 = scmp.lt.s32.totalorder %s270, 31
      %s272 = scalar_select %p271, %s270, 31
      %s273 = smul.addr %s272, 8
      %s274 = scalar_lea.vmem %s0, %s273
      %s275 = smul.u32 16, %s18
      %s276 = smul.u32 16, %s18
      %p277 = scmp.lt.s32.totalorder %s276, 31
      %s278 = scalar_select %p277, %s276, 31
      %s279 = smul.addr %s278, 8
      %s280 = scalar_lea.vmem %s7, %s279
      %s281 = smul.u32 16, %s18
      %v282 = vld [vmem:[%s274] sm:$0xff]
      %v283 = vld [vmem:[%s274 + $0x8] sm:$0xff]
      %v284 = vld [vmem:[%s274 + $0x10] sm:$0xff]
      %v285 = vld [vmem:[%s274 + $0x18] sm:$0xff]
      %v286 = vld [vmem:[%s274 + $0x20] sm:$0xff]
      %v287 = vld [vmem:[%s274 + $0x28] sm:$0xff]
      %v288 = vld [vmem:[%s274 + $0x30] sm:$0xff]
      %v289 = vld [vmem:[%s274 + $0x38] sm:$0xff]
      %v290 = vld [vmem:[%s274 + $0x40] sm:$0xff]
      %v291 = vld [vmem:[%s274 + $0x48] sm:$0xff]
      %v292 = vld [vmem:[%s274 + $0x50] sm:$0xff]
      %v293 = vld [vmem:[%s274 + $0x58] sm:$0xff]
      %v294 = vld [vmem:[%s274 + $0x60] sm:$0xff]
      %v295 = vld [vmem:[%s274 + $0x68] sm:$0xff]
      %v296 = vld [vmem:[%s274 + $0x70] sm:$0xff]
      %v297 = vld [vmem:[%s274 + $0x78] sm:$0xff]
      %v298 = vld [vmem:[%s1] sm:$0xff]
      %v299 = vld [vmem:[%s1 + $0x8] sm:$0xff]
      %v300 = vld [vmem:[%s1 + $0x10] sm:$0xff]
      %v301 = vld [vmem:[%s1 + $0x18] sm:$0xff]
      %v302 = vld [vmem:[%s2] sm:$0x1]
      %v304 = vlaneseq
      %v305 = vshrl.u32 %v304, 7
      %v306 = vsub.s32 0, %v305
      %v307 = vrot.slane %v302, %v306
      %vm309 = vcmask 261120
      %v311 = vsel %vm309, %v282, 0
      %v314 = vsel %vm309, %v283, 0
      %v317 = vsel %vm309, %v284, 0
      %v320 = vsel %vm309, %v285, 0
      %v323 = vsel %vm309, %v286, 0
      %v326 = vsel %vm309, %v287, 0
      %v329 = vsel %vm309, %v288, 0
      %v332 = vsel %vm309, %v289, 0
      %v335 = vsel %vm309, %v290, 0
      %v338 = vsel %vm309, %v291, 0
      %v341 = vsel %vm309, %v292, 0
      %v344 = vsel %vm309, %v293, 0
      %v347 = vsel %vm309, %v294, 0
      %v350 = vsel %vm309, %v295, 0
      %v353 = vsel %vm309, %v296, 0
      %v356 = vsel %vm309, %v297, 0
      %358 = vmatprep.subr.mxu0 0.0
      %359 = vmatpush1.msra.mxu0 %v298
      %360 = vmatprep.subr.mxu0 0.0
      %361 = vmatpush1.msra.mxu0 %v299
      %362 = vmatprep.subr.mxu0 0.0
      %363 = vmatpush1.msra.mxu0 %v300
      %364 = vmatprep.subr.mxu0 0.0
      %365 = vmatpush1.msra.mxu0 %v301
      %366 = vmatprep.subr.mxu0 0.0
      %367 = vmatpush1.msra.mxu0 0.0
      %368 = vmatprep.subr.mxu0 0.0
      %369 = vmatpush1.msra.mxu0 0.0
      %370 = vmatprep.subr.mxu0 0.0
      %371 = vmatpush1.msra.mxu0 0.0
      %372 = vmatprep.subr.mxu0 0.0
      %373 = vmatpush1.msra.mxu0 0.0
      %374 = vmatprep.subr.mxu0 0.0
      %375 = vmatpush1.msra.mxu0 0.0
      %376 = vmatprep.subr.mxu0 0.0
      %377 = vmatpush1.msra.mxu0 0.0
      %378 = vmatprep.subr.mxu0 0.0
      %379 = vmatpush1.msra.mxu0 0.0
      %380 = vmatprep.subr.mxu0 0.0
      %381 = vmatpush1.msra.mxu0 0.0
      %382 = vmatprep.subr.mxu0 0.0
      %383 = vmatpush1.msra.mxu0 0.0
      %384 = vmatprep.subr.mxu0 0.0
      %385 = vmatpush1.msra.mxu0 0.0
      %386 = vmatprep.subr.mxu0 0.0
      %387 = vmatpush1.msra.mxu0 0.0
      %388 = vmatprep.subr.mxu0 0.0
      %389 = vmatpush1.msra.mxu0 0.0
      %390 = vmatprep.subr.mxu0 0.0
      %391 = vmatpush1.msra.mxu0 0.0
      %392 = vmatprep.subr.mxu0 0.0
      %393 = vmatpush1.msra.mxu0 0.0
      %394 = vmatprep.subr.mxu0 0.0
      %395 = vmatpush1.msra.mxu0 0.0
      %396 = vmatprep.subr.mxu0 0.0
      %397 = vmatpush1.msra.mxu0 0.0
      %398 = vmatprep.subr.mxu0 0.0
      %399 = vmatpush1.msra.mxu0 0.0
      %400 = vmatprep.subr.mxu0 0.0
      %401 = vmatpush1.msra.mxu0 0.0
      %402 = vmatprep.subr.mxu0 0.0
      %403 = vmatpush1.msra.mxu0 0.0
      %404 = vmatprep.subr.mxu0 0.0
      %405 = vmatpush1.msra.mxu0 0.0
      %406 = vmatprep.subr.mxu0 0.0
      %407 = vmatpush1.msra.mxu0 0.0
      %408 = vmatprep.subr.mxu0 0.0
      %409 = vmatpush1.msra.mxu0 0.0
      %410 = vmatprep.subr.mxu0 0.0
      %411 = vmatpush1.msra.mxu0 0.0
      %412 = vmatprep.subr.mxu0 0.0
      %413 = vmatpush1.msra.mxu0 0.0
      %414 = vmatprep.subr.mxu0 0.0
      %415 = vmatpush1.msra.mxu0 0.0
      %416 = vmatprep.subr.mxu0 0.0
      %417 = vmatpush1.msra.mxu0 0.0
      %418 = vmatprep.subr.mxu0 0.0
      %419 = vmatpush1.msra.mxu0 0.0
      %420 = vmatprep.subr.mxu0 0.0
      %421 = vmatpush1.msra.mxu0 0.0
      %422 = vmatprep.mubr.f32.mxu0 0.0
      %423 = vmatmul.mubr.f32.gmra.mrb[0].mxu0 %v311
      %v424 = vpop.f32.mrb[0].mxu0
      %v425 = vadd.f32 %v307, %v424
      %v426 = vpop.f32.mrb[0].mxu0
      %427 = vmatprep.mubr.f32.mxu0 0.0
      %428 = vmatmul.mubr.f32.gmra.mrb[0].mxu0 %v314
      %v429 = vpop.f32.mrb[0].mxu0
      %v430 = vadd.f32 %v307, %v429
      %v431 = vpop.f32.mrb[0].mxu0
      %432 = vmatprep.mubr.f32.mxu0 0.0
      %433 = vmatmul.mubr.f32.gmra.mrb[0].mxu0 %v317
      %v434 = vpop.f32.mrb[0].mxu0
      %v435 = vadd.f32 %v307, %v434
      %v436 = vpop.f32.mrb[0].mxu0
      %437 = vmatprep.mubr.f32.mxu0 0.0
      %438 = vmatmul.mubr.f32.gmra.mrb[0].mxu0 %v320
      %v439 = vpop.f32.mrb[0].mxu0
      %v440 = vadd.f32 %v307, %v439
      %v441 = vpop.f32.mrb[0].mxu0
      %442 = vmatprep.mubr.f32.mxu0 0.0
      %443 = vmatmul.mubr.f32.gmra.mrb[0].mxu0 %v323
      %v444 = vpop.f32.mrb[0].mxu0
      %v445 = vadd.f32 %v307, %v444
      %v446 = vpop.f32.mrb[0].mxu0
      %447 = vmatprep.mubr.f32.mxu0 0.0
      %448 = vmatmul.mubr.f32.gmra.mrb[0].mxu0 %v326
      %v449 = vpop.f32.mrb[0].mxu0
      %v450 = vadd.f32 %v307, %v449
      %v451 = vpop.f32.mrb[0].mxu0
      %452 = vmatprep.mubr.f32.mxu0 0.0
      %453 = vmatmul.mubr.f32.gmra.mrb[0].mxu0 %v329
      %v454 = vpop.f32.mrb[0].mxu0
      %v455 = vadd.f32 %v307, %v454
      %v456 = vpop.f32.mrb[0].mxu0
      %457 = vmatprep.mubr.f32.mxu0 0.0
      %458 = vmatmul.mubr.f32.gmra.mrb[0].mxu0 %v332
      %v459 = vpop.f32.mrb[0].mxu0
      %v460 = vadd.f32 %v307, %v459
      %v461 = vpop.f32.mrb[0].mxu0
      %462 = vmatprep.mubr.f32.mxu0 0.0
      %463 = vmatmul.mubr.f32.gmra.mrb[0].mxu0 %v335
      %v464 = vpop.f32.mrb[0].mxu0
      %v465 = vadd.f32 %v307, %v464
      %v466 = vpop.f32.mrb[0].mxu0
      %467 = vmatprep.mubr.f32.mxu0 0.0
      %468 = vmatmul.mubr.f32.gmra.mrb[0].mxu0 %v338
      %v469 = vpop.f32.mrb[0].mxu0
      %v470 = vadd.f32 %v307, %v469
      %v471 = vpop.f32.mrb[0].mxu0
      %472 = vmatprep.mubr.f32.mxu0 0.0
      %473 = vmatmul.mubr.f32.gmra.mrb[0].mxu0 %v341
      %v474 = vpop.f32.mrb[0].mxu0
      %v475 = vadd.f32 %v307, %v474
      %v476 = vpop.f32.mrb[0].mxu0
      %477 = vmatprep.mubr.f32.mxu0 0.0
      %478 = vmatmul.mubr.f32.gmra.mrb[0].mxu0 %v344
      %v479 = vpop.f32.mrb[0].mxu0
      %v480 = vadd.f32 %v307, %v479
      %v481 = vpop.f32.mrb[0].mxu0
      %482 = vmatprep.mubr.f32.mxu0 0.0
      %483 = vmatmul.mubr.f32.gmra.mrb[0].mxu0 %v347
      %v484 = vpop.f32.mrb[0].mxu0
      %v485 = vadd.f32 %v307, %v484
      %v486 = vpop.f32.mrb[0].mxu0
      %487 = vmatprep.mubr.f32.mxu0 0.0
      %488 = vmatmul.mubr.f32.gmra.mrb[0].mxu0 %v350
      %v489 = vpop.f32.mrb[0].mxu0
      %v490 = vadd.f32 %v307, %v489
      %v491 = vpop.f32.mrb[0].mxu0
      %492 = vmatprep.mubr.f32.mxu0 0.0
      %493 = vmatmul.mubr.f32.gmra.mrb[0].mxu0 %v353
      %v494 = vpop.f32.mrb[0].mxu0
      %v495 = vadd.f32 %v307, %v494
      %v496 = vpop.f32.mrb[0].mxu0
      %497 = vmatprep.mubr.f32.mxu0 0.0
      %498 = vmatmul.mubr.f32.gmra.mrb[0].mxu0 %v356
      %v499 = vpop.f32.mrb[0].mxu0
      %v500 = vadd.f32 %v307, %v499
      %v501 = vpop.f32.mrb[0].mxu0
      %502 = vdwg.mxu0
      %v503 = vmax.f32 %v425, 0.0
      %v504 = vmax.f32 %v430, 0.0
      %v505 = vmax.f32 %v435, 0.0
      %v506 = vmax.f32 %v440, 0.0
      %v507 = vmax.f32 %v445, 0.0
      %v508 = vmax.f32 %v450, 0.0
      %v509 = vmax.f32 %v455, 0.0
      %v510 = vmax.f32 %v460, 0.0
      %v511 = vmax.f32 %v465, 0.0
      %v512 = vmax.f32 %v470, 0.0
      %v513 = vmax.f32 %v475, 0.0
      %v514 = vmax.f32 %v480, 0.0
      %v515 = vmax.f32 %v485, 0.0
      %v516 = vmax.f32 %v490, 0.0
      %v517 = vmax.f32 %v495, 0.0
      %v518 = vmax.f32 %v500, 0.0
      %v519 = vld [vmem:[%s3] sm:$0xff]
      %v520 = vld [vmem:[%s3 + $0x8] sm:$0xff]
      %v521 = vld [vmem:[%s3 + $0x10] sm:$0xff]
      %v522 = vld [vmem:[%s3 + $0x18] sm:$0xff]
      %v523 = vld [vmem:[%s3 + $0x20] sm:$0xff]
      %v524 = vld [vmem:[%s3 + $0x28] sm:$0xff]
      %v525 = vld [vmem:[%s3 + $0x30] sm:$0xff]
      %v526 = vld [vmem:[%s3 + $0x38] sm:$0xff]
      %v527 = vld [vmem:[%s3 + $0x40] sm:$0xff]
      %v528 = vld [vmem:[%s3 + $0x48] sm:$0xff]
      %v529 = vld [vmem:[%s3 + $0x50] sm:$0xff]
      %v530 = vld [vmem:[%s3 + $0x58] sm:$0xff]
      %v531 = vld [vmem:[%s3 + $0x60] sm:$0xff]
      %v532 = vld [vmem:[%s3 + $0x68] sm:$0xff]
      %v533 = vld [vmem:[%s3 + $0x70] sm:$0xff]
      %v534 = vld [vmem:[%s3 + $0x78] sm:$0xff]
      %v535 = vld [vmem:[%s4] sm:$0x1]
      %v537 = vlaneseq
      %v538 = vshrl.u32 %v537, 7
      %v539 = vsub.s32 0, %v538
      %v540 = vrot.slane %v535, %v539
      %542 = vmatprep.subr.mxu0 0.0
      %543 = vmatpush1.msra.mxu0 %v519
      %544 = vmatprep.subr.mxu0 0.0
      %545 = vmatpush1.msra.mxu0 %v520
      %546 = vmatprep.subr.mxu0 0.0
      %547 = vmatpush1.msra.mxu0 %v521
      %548 = vmatprep.subr.mxu0 0.0
      %549 = vmatpush1.msra.mxu0 %v522
      %550 = vmatprep.subr.mxu0 0.0
      %551 = vmatpush1.msra.mxu0 %v523
      %552 = vmatprep.subr.mxu0 0.0
      %553 = vmatpush1.msra.mxu0 %v524
      %554 = vmatprep.subr.mxu0 0.0
      %555 = vmatpush1.msra.mxu0 %v525
      %556 = vmatprep.subr.mxu0 0.0
      %557 = vmatpush1.msra.mxu0 %v526
      %558 = vmatprep.subr.mxu0 0.0
      %559 = vmatpush1.msra.mxu0 %v527
      %560 = vmatprep.subr.mxu0 0.0
      %561 = vmatpush1.msra.mxu0 %v528
      %562 = vmatprep.subr.mxu0 0.0
      %563 = vmatpush1.msra.mxu0 %v529
      %564 = vmatprep.subr.mxu0 0.0
      %565 = vmatpush1.msra.mxu0 %v530
      %566 = vmatprep.subr.mxu0 0.0
      %567 = vmatpush1.msra.mxu0 %v531
      %568 = vmatprep.subr.mxu0 0.0
      %569 = vmatpush1.msra.mxu0 %v532
      %570 = vmatprep.subr.mxu0 0.0
      %571 = vmatpush1.msra.mxu0 %v533
      %572 = vmatprep.subr.mxu0 0.0
      %573 = vmatpush1.msra.mxu0 %v534
      %574 = vmatprep.subr.mxu0 0.0
      %575 = vmatpush1.msra.mxu0 0.0
      %576 = vmatprep.subr.mxu0 0.0
      %577 = vmatpush1.msra.mxu0 0.0
      %578 = vmatprep.subr.mxu0 0.0
      %579 = vmatpush1.msra.mxu0 0.0
      %580 = vmatprep.subr.mxu0 0.0
      %581 = vmatpush1.msra.mxu0 0.0
      %582 = vmatprep.subr.mxu0 0.0
      %583 = vmatpush1.msra.mxu0 0.0
      %584 = vmatprep.subr.mxu0 0.0
      %585 = vmatpush1.msra.mxu0 0.0
      %586 = vmatprep.subr.mxu0 0.0
      %587 = vmatpush1.msra.mxu0 0.0
      %588 = vmatprep.subr.mxu0 0.0
      %589 = vmatpush1.msra.mxu0 0.0
      %590 = vmatprep.subr.mxu0 0.0
      %591 = vmatpush1.msra.mxu0 0.0
      %592 = vmatprep.subr.mxu0 0.0
      %593 = vmatpush1.msra.mxu0 0.0
      %594 = vmatprep.subr.mxu0 0.0
      %595 = vmatpush1.msra.mxu0 0.0
      %596 = vmatprep.subr.mxu0 0.0
      %597 = vmatpush1.msra.mxu0 0.0
      %598 = vmatprep.subr.mxu0 0.0
      %599 = vmatpush1.msra.mxu0 0.0
      %600 = vmatprep.subr.mxu0 0.0
      %601 = vmatpush1.msra.mxu0 0.0
      %602 = vmatprep.subr.mxu0 0.0
      %603 = vmatpush1.msra.mxu0 0.0
      %604 = vmatprep.subr.mxu0 0.0
      %605 = vmatpush1.msra.mxu0 0.0
      %606 = vmatprep.mubr.f32.mxu0 0.0
      %607 = vmatmul.mubr.f32.gmra.mrb[0].mxu0 %v503
      %v608 = vpop.f32.mrb[0].mxu0
      %v609 = vadd.f32 %v540, %v608
      %v610 = vpop.f32.mrb[0].mxu0
      %611 = vmatprep.mubr.f32.mxu0 0.0
      %612 = vmatmul.mubr.f32.gmra.mrb[0].mxu0 %v504
      %v613 = vpop.f32.mrb[0].mxu0
      %v614 = vadd.f32 %v540, %v613
      %v615 = vpop.f32.mrb[0].mxu0
      %616 = vmatprep.mubr.f32.mxu0 0.0
      %617 = vmatmul.mubr.f32.gmra.mrb[0].mxu0 %v505
      %v618 = vpop.f32.mrb[0].mxu0
      %v619 = vadd.f32 %v540, %v618
      %v620 = vpop.f32.mrb[0].mxu0
      %621 = vmatprep.mubr.f32.mxu0 0.0
      %622 = vmatmul.mubr.f32.gmra.mrb[0].mxu0 %v506
      %v623 = vpop.f32.mrb[0].mxu0
      %v624 = vadd.f32 %v540, %v623
      %v625 = vpop.f32.mrb[0].mxu0
      %626 = vmatprep.mubr.f32.mxu0 0.0
      %627 = vmatmul.mubr.f32.gmra.mrb[0].mxu0 %v507
      %v628 = vpop.f32.mrb[0].mxu0
      %v629 = vadd.f32 %v540, %v628
      %v630 = vpop.f32.mrb[0].mxu0
      %631 = vmatprep.mubr.f32.mxu0 0.0
      %632 = vmatmul.mubr.f32.gmra.mrb[0].mxu0 %v508
      %v633 = vpop.f32.mrb[0].mxu0
      %v634 = vadd.f32 %v540, %v633
      %v635 = vpop.f32.mrb[0].mxu0
      %636 = vmatprep.mubr.f32.mxu0 0.0
      %637 = vmatmul.mubr.f32.gmra.mrb[0].mxu0 %v509
      %v638 = vpop.f32.mrb[0].mxu0
      %v639 = vadd.f32 %v540, %v638
      %v640 = vpop.f32.mrb[0].mxu0
      %641 = vmatprep.mubr.f32.mxu0 0.0
      %642 = vmatmul.mubr.f32.gmra.mrb[0].mxu0 %v510
      %v643 = vpop.f32.mrb[0].mxu0
      %v644 = vadd.f32 %v540, %v643
      %v645 = vpop.f32.mrb[0].mxu0
      %646 = vmatprep.mubr.f32.mxu0 0.0
      %647 = vmatmul.mubr.f32.gmra.mrb[0].mxu0 %v511
      %v648 = vpop.f32.mrb[0].mxu0
      %v649 = vadd.f32 %v540, %v648
      %v650 = vpop.f32.mrb[0].mxu0
      %651 = vmatprep.mubr.f32.mxu0 0.0
      %652 = vmatmul.mubr.f32.gmra.mrb[0].mxu0 %v512
      %v653 = vpop.f32.mrb[0].mxu0
      %v654 = vadd.f32 %v540, %v653
      %v655 = vpop.f32.mrb[0].mxu0
      %656 = vmatprep.mubr.f32.mxu0 0.0
      %657 = vmatmul.mubr.f32.gmra.mrb[0].mxu0 %v513
      %v658 = vpop.f32.mrb[0].mxu0
      %v659 = vadd.f32 %v540, %v658
      %v660 = vpop.f32.mrb[0].mxu0
      %661 = vmatprep.mubr.f32.mxu0 0.0
      %662 = vmatmul.mubr.f32.gmra.mrb[0].mxu0 %v514
      %v663 = vpop.f32.mrb[0].mxu0
      %v664 = vadd.f32 %v540, %v663
      %v665 = vpop.f32.mrb[0].mxu0
      %666 = vmatprep.mubr.f32.mxu0 0.0
      %667 = vmatmul.mubr.f32.gmra.mrb[0].mxu0 %v515
      %v668 = vpop.f32.mrb[0].mxu0
      %v669 = vadd.f32 %v540, %v668
      %v670 = vpop.f32.mrb[0].mxu0
      %671 = vmatprep.mubr.f32.mxu0 0.0
      %672 = vmatmul.mubr.f32.gmra.mrb[0].mxu0 %v516
      %v673 = vpop.f32.mrb[0].mxu0
      %v674 = vadd.f32 %v540, %v673
      %v675 = vpop.f32.mrb[0].mxu0
      %676 = vmatprep.mubr.f32.mxu0 0.0
      %677 = vmatmul.mubr.f32.gmra.mrb[0].mxu0 %v517
      %v678 = vpop.f32.mrb[0].mxu0
      %v679 = vadd.f32 %v540, %v678
      %v680 = vpop.f32.mrb[0].mxu0
      %681 = vmatprep.mubr.f32.mxu0 0.0
      %682 = vmatmul.mubr.f32.gmra.mrb[0].mxu0 %v518
      %v683 = vpop.f32.mrb[0].mxu0
      %v684 = vadd.f32 %v540, %v683
      %v685 = vpop.f32.mrb[0].mxu0
      %686 = vdwg.mxu0
      %v687 = vmax.f32 %v609, 0.0
      %v688 = vmax.f32 %v614, 0.0
      %v689 = vmax.f32 %v619, 0.0
      %v690 = vmax.f32 %v624, 0.0
      %v691 = vmax.f32 %v629, 0.0
      %v692 = vmax.f32 %v634, 0.0
      %v693 = vmax.f32 %v639, 0.0
      %v694 = vmax.f32 %v644, 0.0
      %v695 = vmax.f32 %v649, 0.0
      %v696 = vmax.f32 %v654, 0.0
      %v697 = vmax.f32 %v659, 0.0
      %v698 = vmax.f32 %v664, 0.0
      %v699 = vmax.f32 %v669, 0.0
      %v700 = vmax.f32 %v674, 0.0
      %v701 = vmax.f32 %v679, 0.0
      %v702 = vmax.f32 %v684, 0.0
      %v703 = vld [vmem:[%s5] sm:$0xff]
      %v704 = vld [vmem:[%s5 + $0x8] sm:$0xff]
      %v705 = vld [vmem:[%s5 + $0x10] sm:$0xff]
      %v706 = vld [vmem:[%s5 + $0x18] sm:$0xff]
      %v707 = vld [vmem:[%s5 + $0x20] sm:$0xff]
      %v708 = vld [vmem:[%s5 + $0x28] sm:$0xff]
      %v709 = vld [vmem:[%s5 + $0x30] sm:$0xff]
      %v710 = vld [vmem:[%s5 + $0x38] sm:$0xff]
      %v711 = vld [vmem:[%s5 + $0x40] sm:$0xff]
      %v712 = vld [vmem:[%s5 + $0x48] sm:$0xff]
      %v713 = vld [vmem:[%s5 + $0x50] sm:$0xff]
      %v714 = vld [vmem:[%s5 + $0x58] sm:$0xff]
      %v715 = vld [vmem:[%s5 + $0x60] sm:$0xff]
      %v716 = vld [vmem:[%s5 + $0x68] sm:$0xff]
      %v717 = vld [vmem:[%s5 + $0x70] sm:$0xff]
      %v718 = vld [vmem:[%s5 + $0x78] sm:$0xff]
      %v719 = vld [vmem:[%s6] sm:$0x1]
      %v721 = vlaneseq
      %v722 = vshrl.u32 %v721, 7
      %v723 = vsub.s32 0, %v722
      %v724 = vrot.slane %v719, %v723
      %726 = vmatprep.subr.mxu0 0.0
      %727 = vmatpush1.msra.mxu0 %v703
      %728 = vmatprep.subr.mxu0 0.0
      %729 = vmatpush1.msra.mxu0 %v704
      %730 = vmatprep.subr.mxu0 0.0
      %731 = vmatpush1.msra.mxu0 %v705
      %732 = vmatprep.subr.mxu0 0.0
      %733 = vmatpush1.msra.mxu0 %v706
      %734 = vmatprep.subr.mxu0 0.0
      %735 = vmatpush1.msra.mxu0 %v707
      %736 = vmatprep.subr.mxu0 0.0
      %737 = vmatpush1.msra.mxu0 %v708
      %738 = vmatprep.subr.mxu0 0.0
      %739 = vmatpush1.msra.mxu0 %v709
      %740 = vmatprep.subr.mxu0 0.0
      %741 = vmatpush1.msra.mxu0 %v710
      %742 = vmatprep.subr.mxu0 0.0
      %743 = vmatpush1.msra.mxu0 %v711
      %744 = vmatprep.subr.mxu0 0.0
      %745 = vmatpush1.msra.mxu0 %v712
      %746 = vmatprep.subr.mxu0 0.0
      %747 = vmatpush1.msra.mxu0 %v713
      %748 = vmatprep.subr.mxu0 0.0
      %749 = vmatpush1.msra.mxu0 %v714
      %750 = vmatprep.subr.mxu0 0.0
      %751 = vmatpush1.msra.mxu0 %v715
      %752 = vmatprep.subr.mxu0 0.0
      %753 = vmatpush1.msra.mxu0 %v716
      %754 = vmatprep.subr.mxu0 0.0
      %755 = vmatpush1.msra.mxu0 %v717
      %756 = vmatprep.subr.mxu0 0.0
      %757 = vmatpush1.msra.mxu0 %v718
      %758 = vmatprep.subr.mxu0 0.0
      %759 = vmatpush1.msra.mxu0 0.0
      %760 = vmatprep.subr.mxu0 0.0
      %761 = vmatpush1.msra.mxu0 0.0
      %762 = vmatprep.subr.mxu0 0.0
      %763 = vmatpush1.msra.mxu0 0.0
      %764 = vmatprep.subr.mxu0 0.0
      %765 = vmatpush1.msra.mxu0 0.0
      %766 = vmatprep.subr.mxu0 0.0
      %767 = vmatpush1.msra.mxu0 0.0
      %768 = vmatprep.subr.mxu0 0.0
      %769 = vmatpush1.msra.mxu0 0.0
      %770 = vmatprep.subr.mxu0 0.0
      %771 = vmatpush1.msra.mxu0 0.0
      %772 = vmatprep.subr.mxu0 0.0
      %773 = vmatpush1.msra.mxu0 0.0
      %774 = vmatprep.subr.mxu0 0.0
      %775 = vmatpush1.msra.mxu0 0.0
      %776 = vmatprep.subr.mxu0 0.0
      %777 = vmatpush1.msra.mxu0 0.0
      %778 = vmatprep.subr.mxu0 0.0
      %779 = vmatpush1.msra.mxu0 0.0
      %780 = vmatprep.subr.mxu0 0.0
      %781 = vmatpush1.msra.mxu0 0.0
      %782 = vmatprep.subr.mxu0 0.0
      %783 = vmatpush1.msra.mxu0 0.0
      %784 = vmatprep.subr.mxu0 0.0
      %785 = vmatpush1.msra.mxu0 0.0
      %786 = vmatprep.subr.mxu0 0.0
      %787 = vmatpush1.msra.mxu0 0.0
      %788 = vmatprep.subr.mxu0 0.0
      %789 = vmatpush1.msra.mxu0 0.0
      %790 = vmatprep.mubr.f32.mxu0 0.0
      %791 = vmatmul.mubr.f32.gmra.mrb[0].mxu0 %v687
      %v792 = vpop.f32.mrb[0].mxu0
      %v793 = vadd.f32 %v724, %v792
      %v794 = vpop.f32.mrb[0].mxu0
      %795 = vmatprep.mubr.f32.mxu0 0.0
      %796 = vmatmul.mubr.f32.gmra.mrb[0].mxu0 %v688
      %v797 = vpop.f32.mrb[0].mxu0
      %v798 = vadd.f32 %v724, %v797
      %v799 = vpop.f32.mrb[0].mxu0
      %800 = vmatprep.mubr.f32.mxu0 0.0
      %801 = vmatmul.mubr.f32.gmra.mrb[0].mxu0 %v689
      %v802 = vpop.f32.mrb[0].mxu0
      %v803 = vadd.f32 %v724, %v802
      %v804 = vpop.f32.mrb[0].mxu0
      %805 = vmatprep.mubr.f32.mxu0 0.0
      %806 = vmatmul.mubr.f32.gmra.mrb[0].mxu0 %v690
      %v807 = vpop.f32.mrb[0].mxu0
      %v808 = vadd.f32 %v724, %v807
      %v809 = vpop.f32.mrb[0].mxu0
      %810 = vmatprep.mubr.f32.mxu0 0.0
      %811 = vmatmul.mubr.f32.gmra.mrb[0].mxu0 %v691
      %v812 = vpop.f32.mrb[0].mxu0
      %v813 = vadd.f32 %v724, %v812
      %v814 = vpop.f32.mrb[0].mxu0
      %815 = vmatprep.mubr.f32.mxu0 0.0
      %816 = vmatmul.mubr.f32.gmra.mrb[0].mxu0 %v692
      %v817 = vpop.f32.mrb[0].mxu0
      %v818 = vadd.f32 %v724, %v817
      %v819 = vpop.f32.mrb[0].mxu0
      %820 = vmatprep.mubr.f32.mxu0 0.0
      %821 = vmatmul.mubr.f32.gmra.mrb[0].mxu0 %v693
      %v822 = vpop.f32.mrb[0].mxu0
      %v823 = vadd.f32 %v724, %v822
      %v824 = vpop.f32.mrb[0].mxu0
      %825 = vmatprep.mubr.f32.mxu0 0.0
      %826 = vmatmul.mubr.f32.gmra.mrb[0].mxu0 %v694
      %v827 = vpop.f32.mrb[0].mxu0
      %v828 = vadd.f32 %v724, %v827
      %v829 = vpop.f32.mrb[0].mxu0
      %830 = vmatprep.mubr.f32.mxu0 0.0
      %831 = vmatmul.mubr.f32.gmra.mrb[0].mxu0 %v695
      %v832 = vpop.f32.mrb[0].mxu0
      %v833 = vadd.f32 %v724, %v832
      %v834 = vpop.f32.mrb[0].mxu0
      %835 = vmatprep.mubr.f32.mxu0 0.0
      %836 = vmatmul.mubr.f32.gmra.mrb[0].mxu0 %v696
      %v837 = vpop.f32.mrb[0].mxu0
      %v838 = vadd.f32 %v724, %v837
      %v839 = vpop.f32.mrb[0].mxu0
      %840 = vmatprep.mubr.f32.mxu0 0.0
      %841 = vmatmul.mubr.f32.gmra.mrb[0].mxu0 %v697
      %v842 = vpop.f32.mrb[0].mxu0
      %v843 = vadd.f32 %v724, %v842
      %v844 = vpop.f32.mrb[0].mxu0
      %845 = vmatprep.mubr.f32.mxu0 0.0
      %846 = vmatmul.mubr.f32.gmra.mrb[0].mxu0 %v698
      %v847 = vpop.f32.mrb[0].mxu0
      %v848 = vadd.f32 %v724, %v847
      %v849 = vpop.f32.mrb[0].mxu0
      %850 = vmatprep.mubr.f32.mxu0 0.0
      %851 = vmatmul.mubr.f32.gmra.mrb[0].mxu0 %v699
      %v852 = vpop.f32.mrb[0].mxu0
      %v853 = vadd.f32 %v724, %v852
      %v854 = vpop.f32.mrb[0].mxu0
      %855 = vmatprep.mubr.f32.mxu0 0.0
      %856 = vmatmul.mubr.f32.gmra.mrb[0].mxu0 %v700
      %v857 = vpop.f32.mrb[0].mxu0
      %v858 = vadd.f32 %v724, %v857
      %v859 = vpop.f32.mrb[0].mxu0
      %860 = vmatprep.mubr.f32.mxu0 0.0
      %861 = vmatmul.mubr.f32.gmra.mrb[0].mxu0 %v701
      %v862 = vpop.f32.mrb[0].mxu0
      %v863 = vadd.f32 %v724, %v862
      %v864 = vpop.f32.mrb[0].mxu0
      %865 = vmatprep.mubr.f32.mxu0 0.0
      %866 = vmatmul.mubr.f32.gmra.mrb[0].mxu0 %v702
      %v867 = vpop.f32.mrb[0].mxu0
      %v868 = vadd.f32 %v724, %v867
      %v869 = vpop.f32.mrb[0].mxu0
      %870 = vdwg.mxu0
      %vm871 = vcmask 130048
      %872 = vst.msk [vmem:[%s280] sm:$0xff] %vm871, %v793
      %873 = vst.msk [vmem:[%s280 + $0x8] sm:$0xff] %vm871, %v798
      %874 = vst.msk [vmem:[%s280 + $0x10] sm:$0xff] %vm871, %v803
      %875 = vst.msk [vmem:[%s280 + $0x18] sm:$0xff] %vm871, %v808
      %876 = vst.msk [vmem:[%s280 + $0x20] sm:$0xff] %vm871, %v813
      %877 = vst.msk [vmem:[%s280 + $0x28] sm:$0xff] %vm871, %v818
      %878 = vst.msk [vmem:[%s280 + $0x30] sm:$0xff] %vm871, %v823
      %879 = vst.msk [vmem:[%s280 + $0x38] sm:$0xff] %vm871, %v828
      %880 = vst.msk [vmem:[%s280 + $0x40] sm:$0xff] %vm871, %v833
      %881 = vst.msk [vmem:[%s280 + $0x48] sm:$0xff] %vm871, %v838
      %882 = vst.msk [vmem:[%s280 + $0x50] sm:$0xff] %vm871, %v843
      %883 = vst.msk [vmem:[%s280 + $0x58] sm:$0xff] %vm871, %v848
      %884 = vst.msk [vmem:[%s280 + $0x60] sm:$0xff] %vm871, %v853
      %885 = vst.msk [vmem:[%s280 + $0x68] sm:$0xff] %vm871, %v858
      %886 = vst.msk [vmem:[%s280 + $0x70] sm:$0xff] %vm871, %v863
      %887 = vst.msk [vmem:[%s280 + $0x78] sm:$0xff] %vm871, %v868
      %s888 = smul.u32 16, %s18
      %p889 = scmp.lt.s32.totalorder %s888, 31
      %s890 = scalar_select %p889, %s888, 31
      %s891 = smul.addr %s890, 8
      %s892 = scalar_lea.vmem %s7, %s891
      // Predicated region
      $region49: #{tpu_custom_call.1} parent=47 // pred_check
        %p893 = pneg %p188
      $region50: #{tpu_custom_call.1} parent=47 // pred_check_branch
        %895 = sbr.rel (%p893) target = $region52
      $region51: #{tpu_custom_call.1} parent=47 // pred_region
        %s896 = smul.u32 16, %s18
      $region52: #{tpu_custom_call.1} parent=47 // pred_fallthru
        _
    $region48: #{tpu_custom_call.1} parent=5 // pred_fallthru
      _
    %p897 = scmp.le.s32.totalorder 2, %s13
    // Predicated region
    $region53: #{tpu_custom_call.1} parent=5 // pred_check
      %p898 = pneg %p897
    $region54: #{tpu_custom_call.1} parent=5 // pred_check_branch
      %900 = sbr.rel (%p898) target = $region56
    $region55: #{tpu_custom_call.1} parent=5 // pred_region
      %s901 = ssub.s32 %s13, 2
      // Predicated region
      $region57: #{tpu_custom_call.1} parent=55 // pred_check
        %p902 = pneg %p194
      $region58: #{tpu_custom_call.1} parent=55 // pred_check_branch
        %904 = sbr.rel (%p902) target = $region60
      $region59: #{tpu_custom_call.1} parent=55 // pred_region
        %s905 = smul.u32 16, %s19
        %p906 = scmp.lt.s32.totalorder %s905, 31
        %s907 = scalar_select %p906, %s905, 31
        %s908 = smul.addr %s907, 8
        %s909 = scalar_lea.vmem %s7, %s908
      $region60: #{tpu_custom_call.1} parent=55 // pred_fallthru
        _
    $region56: #{tpu_custom_call.1} parent=5 // pred_fallthru
      _
  $region6: #{tpu_custom_call.1} parent=0 // loop_footer
    %s17 = sadd.s32 1, %s13
  $region7: #{tpu_custom_call.1} parent=0 // loop_footer_branch
    %12 = sbr.rel target = $region3
  $region8: #{tpu_custom_call.1} parent=0 // loop_exit
    _

// kernel: tpu_custom_call.1
$region0: #{tpu_custom_call.1}
  #allocation0 [shape = 'u32[]', space=smem, size = 0x4, offset = 0x4, fixed_abs, tag = 'smem constant byte address 0x4 - core index']
  #allocation1 [shape = 'u32[144,128]{1,0:T(1,128)}', space=vmem, size = 0x12000, scoped, tag = 'internal scratch']
  %s0 = inlined_call_operand.vmem [shape: f32[256,32], index: 0, kind: input, shape index: {}]
  %s1 = inlined_call_operand.vmem [shape: f32[32,128], index: 1, kind: input, shape index: {}]
  %s2 = inlined_call_operand.vmem [shape: f32[1,128], index: 2, kind: input, shape index: {}]
  %s3 = inlined_call_operand.vmem [shape: f32[128,128], index: 3, kind: input, shape index: {}]
  %s4 = inlined_call_operand.vmem [shape: f32[1,128], index: 4, kind: input, shape index: {}]
  %s5 = inlined_call_operand.vmem [shape: f32[128,16], index: 5, kind: input, shape index: {}]
  %s6 = inlined_call_operand.vmem [shape: f32[1,16], index: 6, kind: input, shape index: {}]
  %s7 = inlined_call_operand.vmem [shape: f32[256,16], index: 7, kind: output, shape index: {}]
  %s8 = sld [smem:[#allocation0]]
  $region61: #{tpu_custom_call.1} parent=0
    _
  %s10 = ssub.s32 1, %s8
  %s11 = scalar_select 0, %s10, %s8
  loop: start=0, step=1, limit=4
  $region2: #{tpu_custom_call.1} parent=0 // loop_pre_header
    _
  $region3: #{tpu_custom_call.1} parent=0 // loop_header
    %s13 = sphi 0, %s17
    %p14 = scmp.ge.s32.totalorder %s13, 4
    %s23 = sphi 0, %s25
    %s26 = sphi 0, %s23
    %s27 = sphi 0, %s26
    %s43 = sphi 0, %s27
    %s47 = sphi 0, %s47
    %s49 = sphi 0, %s47
    %s50 = sphi 0, %s49
    %s64 = sphi 0, %s50
    %s68 = sphi 0, %s68
    %s70 = sphi 0, %s68
    %s71 = sphi 0, %s70
    %s85 = sphi 0, %s71
    %s89 = sphi 0, %s89
    %s91 = sphi 0, %s89
    %s92 = sphi 0, %s91
    %s106 = sphi 0, %s92
    %s110 = sphi 0, %s110
    %s112 = sphi 0, %s110
    %s113 = sphi 0, %s112
    %s127 = sphi 0, %s113
    %s131 = sphi 0, %s131
    %s133 = sphi 0, %s131
    %s134 = sphi 0, %s133
    %s148 = sphi 0, %s134
    %s152 = sphi 0, %s152
    %s154 = sphi 0, %s152
    %s155 = sphi 0, %s154
    %s169 = sphi 0, %s155
    %s175 = sphi 0, %s177
    %s178 = sphi 0, %s175
    %s179 = sphi 0, %s178
    %s195 = sphi 0, %s179
  $region4: #{tpu_custom_call.1} parent=0 // loop_header_branch
    %16 = sbr.rel (%p14) target = $region8
  $region5: #{tpu_custom_call.1} parent=0 // loop_body
    %s18 = ssub.s32 %s13, 1
    %s19 = ssub.s32 %s13, 2
    %s20 = sadd.s32 %s13, 1
    %s21 = ssub.s32 %s13, %s20
    %p22 = scmp.eq.s32.totalorder %s21, 0
    %s24 = sadd.s32 %s23, 1
    %s25 = scalar_select %p22, %s23, %s24
    %p28 = pneg %p22
    %p29 = scmp.eq.s32.totalorder %s13, 1
    %p30 = por %p28, %p29
    %p31 = scmp.ne.s32.totalorder %s23, %s26
    %p32 = scmp.eq.s32.totalorder %s13, 0
    %p33 = por %p31, %p32
    %p34 = scmp.ne.s32.totalorder %s23, %s26
    %p35 = scmp.eq.s32.totalorder %s18, 1
    %p36 = por %p34, %p35
    %p37 = scmp.ne.s32.totalorder %s26, %s27
    %p38 = scmp.eq.s32.totalorder %s18, 0
    %p39 = por %p37, %p38
    %p40 = scmp.ne.s32.totalorder %s26, %s27
    %p41 = scmp.eq.s32.totalorder %s19, 1
    %p42 = por %p40, %p41
    %p44 = scmp.ne.s32.totalorder %s27, %s43
    %p45 = scmp.eq.s32.totalorder %s19, 0
    %p46 = por %p44, %p45
    %s48 = sadd.s32 %s47, 1
    %p51 = scmp.eq.s32.totalorder %s13, 1
    %p52 = scmp.ne.s32.totalorder %s47, %s49
    %p53 = scmp.eq.s32.totalorder %s13, 0
    %p54 = por %p52, %p53
    %p55 = scmp.ne.s32.totalorder %s47, %s49
    %p56 = scmp.eq.s32.totalorder %s18, 1
    %p57 = por %p55, %p56
    %p58 = scmp.ne.s32.totalorder %s49, %s50
    %p59 = scmp.eq.s32.totalorder %s18, 0
    %p60 = por %p58, %p59
    %p61 = scmp.ne.s32.totalorder %s49, %s50
    %p62 = scmp.eq.s32.totalorder %s19, 1
    %p63 = por %p61, %p62
    %p65 = scmp.ne.s32.totalorder %s50, %s64
    %p66 = scmp.eq.s32.totalorder %s19, 0
    %p67 = por %p65, %p66
    %s69 = sadd.s32 %s68, 1
    %p72 = scmp.eq.s32.totalorder %s13, 1
    %p73 = scmp.ne.s32.totalorder %s68, %s70
    %p74 = scmp.eq.s32.totalorder %s13, 0
    %p75 = por %p73, %p74
    %p76 = scmp.ne.s32.totalorder %s68, %s70
    %p77 = scmp.eq.s32.totalorder %s18, 1
    %p78 = por %p76, %p77
    %p79 = scmp.ne.s32.totalorder %s70, %s71
    %p80 = scmp.eq.s32.totalorder %s18, 0
    %p81 = por %p79, %p80
    %p82 = scmp.ne.s32.totalorder %s70, %s71
    %p83 = scmp.eq.s32.totalorder %s19, 1
    %p84 = por %p82, %p83
    %p86 = scmp.ne.s32.totalorder %s71, %s85
    %p87 = scmp.eq.s32.totalorder %s19, 0
    %p88 = por %p86, %p87
    %s90 = sadd.s32 %s89, 1
    %p93 = scmp.eq.s32.totalorder %s13, 1
    %p94 = scmp.ne.s32.totalorder %s89, %s91
    %p95 = scmp.eq.s32.totalorder %s13, 0
    %p96 = por %p94, %p95
    %p97 = scmp.ne.s32.totalorder %s89, %s91
    %p98 = scmp.eq.s32.totalorder %s18, 1
    %p99 = por %p97, %p98
    %p100 = scmp.ne.s32.totalorder %s91, %s92
    %p101 = scmp.eq.s32.totalorder %s18, 0
    %p102 = por %p100, %p101
    %p103 = scmp.ne.s32.totalorder %s91, %s92
    %p104 = scmp.eq.s32.totalorder %s19, 1
    %p105 = por %p103, %p104
    %p107 = scmp.ne.s32.totalorder %s92, %s106
    %p108 = scmp.eq.s32.totalorder %s19, 0
    %p109 = por %p107, %p108
    %s111 = sadd.s32 %s110, 1
    %p114 = scmp.eq.s32.totalorder %s13, 1
    %p115 = scmp.ne.s32.totalorder %s110, %s112
    %p116 = scmp.eq.s32.totalorder %s13, 0
    %p117 = por %p115, %p116
    %p118 = scmp.ne.s32.totalorder %s110, %s112
    %p119 = scmp.eq.s32.totalorder %s18, 1
    %p120 = por %p118, %p119
    %p121 = scmp.ne.s32.totalorder %s112, %s113
    %p122 = scmp.eq.s32.totalorder %s18, 0
    %p123 = por %p121, %p122
    %p124 = scmp.ne.s32.totalorder %s112, %s113
    %p125 = scmp.eq.s32.totalorder %s19, 1
    %p126 = por %p124, %p125
    %p128 = scmp.ne.s32.totalorder %s113, %s127
    %p129 = scmp.eq.s32.totalorder %s19, 0
    %p130 = por %p128, %p129
    %s132 = sadd.s32 %s131, 1
    %p135 = scmp.eq.s32.totalorder %s13, 1
    %p136 = scmp.ne.s32.totalorder %s131, %s133
    %p137 = scmp.eq.s32.totalorder %s13, 0
    %p138 = por %p136, %p137
    %p139 = scmp.ne.s32.totalorder %s131, %s133
    %p140 = scmp.eq.s32.totalorder %s18, 1
    %p141 = por %p139, %p140
    %p142 = scmp.ne.s32.totalorder %s133, %s134
    %p143 = scmp.eq.s32.totalorder %s18, 0
    %p144 = por %p142, %p143
    %p145 = scmp.ne.s32.totalorder %s133, %s134
    %p146 = scmp.eq.s32.totalorder %s19, 1
    %p147 = por %p145, %p146
    %p149 = scmp.ne.s32.totalorder %s134, %s148
    %p150 = scmp.eq.s32.totalorder %s19, 0
    %p151 = por %p149, %p150
    %s153 = sadd.s32 %s152, 1
    %p156 = scmp.eq.s32.totalorder %s13, 1
    %p157 = scmp.ne.s32.totalorder %s152, %s154
    %p158 = scmp.eq.s32.totalorder %s13, 0
    %p159 = por %p157, %p158
    %p160 = scmp.ne.s32.totalorder %s152, %s154
    %p161 = scmp.eq.s32.totalorder %s18, 1
    %p162 = por %p160, %p161
    %p163 = scmp.ne.s32.totalorder %s154, %s155
    %p164 = scmp.eq.s32.totalorder %s18, 0
    %p165 = por %p163, %p164
    %p166 = scmp.ne.s32.totalorder %s154, %s155
    %p167 = scmp.eq.s32.totalorder %s19, 1
    %p168 = por %p166, %p167
    %p170 = scmp.ne.s32.totalorder %s155, %s169
    %p171 = scmp.eq.s32.totalorder %s19, 0
    %p172 = por %p170, %p171
    %s173 = ssub.s32 %s13, %s20
    %p174 = scmp.eq.s32.totalorder %s173, 0
    %s176 = sadd.s32 %s175, 1
    %s177 = scalar_select %p174, %s175, %s176
    %p180 = pneg %p174
    %p181 = scmp.eq.s32.totalorder %s13, 1
    %p182 = por %p180, %p181
    %p183 = scmp.ne.s32.totalorder %s175, %s178
    %p184 = scmp.eq.s32.totalorder %s13, 0
    %p185 = por %p183, %p184
    %p186 = scmp.ne.s32.totalorder %s175, %s178
    %p187 = scmp.eq.s32.totalorder %s18, 1
    %p188 = por %p186, %p187
    %p189 = scmp.ne.s32.totalorder %s178, %s179
    %p190 = scmp.eq.s32.totalorder %s18, 0
    %p191 = por %p189, %p190
    %p192 = scmp.ne.s32.totalorder %s178, %s179
    %p193 = scmp.eq.s32.totalorder %s19, 1
    %p194 = por %p192, %p193
    %p196 = scmp.ne.s32.totalorder %s179, %s195
    %p197 = scmp.eq.s32.totalorder %s19, 0
    %p198 = por %p196, %p197
    %p199 = scmp.le.s32.totalorder 1, %s13
    %p200 = scmp.lt.s32.totalorder %s13, 3
    %p201 = pnand %p199, %p200
    %p202 = pneg %p201
    // Predicated region
    $region9: #{tpu_custom_call.1} parent=5 // pred_check
      _
    $region10: #{tpu_custom_call.1} parent=5 // pred_check_branch
      %204 = sbr.rel (%p201) target = $region12
    $region11: #{tpu_custom_call.1} parent=5 // pred_region
      %s205 = ssub.s32 %s13, 1
      // Predicated region
      $region13: #{tpu_custom_call.1} parent=11 // pred_check
        %p206 = pneg %p60
      $region14: #{tpu_custom_call.1} parent=11 // pred_check_branch
        %208 = sbr.rel (%p206) target = $region16
      $region15: #{tpu_custom_call.1} parent=11 // pred_region
        _
      $region16: #{tpu_custom_call.1} parent=11 // pred_fallthru
        _
      // Predicated region
      $region17: #{tpu_custom_call.1} parent=11 // pred_check
        %p209 = pneg %p81
      $region18: #{tpu_custom_call.1} parent=11 // pred_check_branch
        %211 = sbr.rel (%p209) target = $region20
      $region19: #{tpu_custom_call.1} parent=11 // pred_region
        _
      $region20: #{tpu_custom_call.1} parent=11 // pred_fallthru
        _
      // Predicated region
      $region21: #{tpu_custom_call.1} parent=11 // pred_check
        %p212 = pneg %p102
      $region22: #{tpu_custom_call.1} parent=11 // pred_check_branch
        %214 = sbr.rel (%p212) target = $region24
      $region23: #{tpu_custom_call.1} parent=11 // pred_region
        _
      $region24: #{tpu_custom_call.1} parent=11 // pred_fallthru
        _
      // Predicated region
      $region25: #{tpu_custom_call.1} parent=11 // pred_check
        %p215 = pneg %p123
      $region26: #{tpu_custom_call.1} parent=11 // pred_check_branch
        %217 = sbr.rel (%p215) target = $region28
      $region27: #{tpu_custom_call.1} parent=11 // pred_region
        _
      $region28: #{tpu_custom_call.1} parent=11 // pred_fallthru
        _
      // Predicated region
      $region29: #{tpu_custom_call.1} parent=11 // pred_check
        %p218 = pneg %p144
      $region30: #{tpu_custom_call.1} parent=11 // pred_check_branch
        %220 = sbr.rel (%p218) target = $region32
      $region31: #{tpu_custom_call.1} parent=11 // pred_region
        _
      $region32: #{tpu_custom_call.1} parent=11 // pred_fallthru
        _
      // Predicated region
      $region33: #{tpu_custom_call.1} parent=11 // pred_check
        %p221 = pneg %p165
      $region34: #{tpu_custom_call.1} parent=11 // pred_check_branch
        %223 = sbr.rel (%p221) target = $region36
      $region35: #{tpu_custom_call.1} parent=11 // pred_region
        _
      $region36: #{tpu_custom_call.1} parent=11 // pred_fallthru
        _
    $region12: #{tpu_custom_call.1} parent=5 // pred_fallthru
      _
    %p224 = scmp.lt.s32.totalorder %s13, 2
    // Predicated region
    $region37: #{tpu_custom_call.1} parent=5 // pred_check
      %p225 = pneg %p224
    $region38: #{tpu_custom_call.1} parent=5 // pred_check_branch
      %227 = sbr.rel (%p225) target = $region40
    $region39: #{tpu_custom_call.1} parent=5 // pred_region
      // Predicated region
      $region41: #{tpu_custom_call.1} parent=39 // pred_check
        %p228 = pneg %p33
      $region42: #{tpu_custom_call.1} parent=39 // pred_check_branch
        %230 = sbr.rel (%p228) target = $region44
      $region43: #{tpu_custom_call.1} parent=39 // pred_region
        %s231 = smul.u32 16, %s13
        %p232 = scmp.lt.s32.totalorder %s231, 31
        %s233 = scalar_select %p232, %s231, 31
        %s234 = smul.addr %s233, 8
        %s235 = scalar_lea.vmem %s0, %s234
        %s236 = smul.u32 16, %s13
      $region44: #{tpu_custom_call.1} parent=39 // pred_fallthru
        _
    $region40: #{tpu_custom_call.1} parent=5 // pred_fallthru
      _
    %p237 = scmp.le.s32.totalorder 1, %s13
    %p238 = scmp.lt.s32.totalorder %s13, 3
    %p239 = pnand %p237, %p238
    %p240 = pneg %p239
    // Predicated region
    $region45: #{tpu_custom_call.1} parent=5 // pred_check
      _
    $region46: #{tpu_custom_call.1} parent=5 // pred_check_branch
      %242 = sbr.rel (%p239) target = $region48
    $region47: #{tpu_custom_call.1} parent=5 // pred_region
      %s243 = ssub.s32 %s13, 1
      %s244 = smul.u32 16, %s18
      %p245 = scmp.lt.s32.totalorder %s244, 31
      %s246 = scalar_select %p245, %s244, 31
      %s247 = smul.addr %s246, 8
      %s248 = scalar_lea.vmem %s0, %s247
      %p249 = pneg %p39
      %p250 = pneg %p36
      %p251 = pneg %p60
      %p252 = pneg %p57
      %p253 = pneg %p81
      %p254 = pneg %p78
      %p255 = pneg %p102
      %p256 = pneg %p99
      %p257 = pneg %p123
      %p258 = pneg %p120
      %p259 = pneg %p144
      %p260 = pneg %p141
      %p261 = pneg %p165
      %p262 = pneg %p162
      %p263 = pneg %p191
      %p264 = pneg %p188
      %s265 = smul.u32 16, %s18
      %p266 = scmp.lt.s32.totalorder %s265, 31
      %s267 = scalar_select %p266, %s265, 31
      %s268 = smul.addr %s267, 8
      %s269 = scalar_lea.vmem %s7, %s268
      %s270 = smul.u32 16, %s18
      %p271 = scmp.lt.s32.totalorder %s270, 31
      %s272 = scalar_select %p271, %s270, 31
      %s273 = smul.addr %s272, 8
      %s274 = scalar_lea.vmem %s0, %s273
      %s275 = smul.u32 16, %s18
      %s276 = smul.u32 16, %s18
      %p277 = scmp.lt.s32.totalorder %s276, 31
      %s278 = scalar_select %p277, %s276, 31
      %s279 = smul.addr %s278, 8
      %s280 = scalar_lea.vmem %s7, %s279
      %s281 = smul.u32 16, %s18
      %v282 = vld [vmem:[%s274] sm:$0xff]
      %v283 = vld [vmem:[%s274 + $0x8] sm:$0xff]
      %v284 = vld [vmem:[%s274 + $0x10] sm:$0xff]
      %v285 = vld [vmem:[%s274 + $0x18] sm:$0xff]
      %v286 = vld [vmem:[%s274 + $0x20] sm:$0xff]
      %v287 = vld [vmem:[%s274 + $0x28] sm:$0xff]
      %v288 = vld [vmem:[%s274 + $0x30] sm:$0xff]
      %v289 = vld [vmem:[%s274 + $0x38] sm:$0xff]
      %v290 = vld [vmem:[%s274 + $0x40] sm:$0xff]
      %v291 = vld [vmem:[%s274 + $0x48] sm:$0xff]
      %v292 = vld [vmem:[%s274 + $0x50] sm:$0xff]
      %v293 = vld [vmem:[%s274 + $0x58] sm:$0xff]
      %v294 = vld [vmem:[%s274 + $0x60] sm:$0xff]
      %v295 = vld [vmem:[%s274 + $0x68] sm:$0xff]
      %v296 = vld [vmem:[%s274 + $0x70] sm:$0xff]
      %v297 = vld [vmem:[%s274 + $0x78] sm:$0xff]
      %v298 = vld [vmem:[%s1] sm:$0xff]
      %v299 = vld [vmem:[%s1 + $0x8] sm:$0xff]
      %v300 = vld [vmem:[%s1 + $0x10] sm:$0xff]
      %v301 = vld [vmem:[%s1 + $0x18] sm:$0xff]
      %v302 = vld [vmem:[%s2] sm:$0x1]
      %v304 = vlaneseq
      %v305 = vshrl.u32 %v304, 7
      %v306 = vsub.s32 0, %v305
      %v307 = vrot.slane %v302, %v306
      %vm309 = vcmask 261120
      %v311 = vsel %vm309, %v282, 0
      %v314 = vsel %vm309, %v283, 0
      %v317 = vsel %vm309, %v284, 0
      %v320 = vsel %vm309, %v285, 0
      %v323 = vsel %vm309, %v286, 0
      %v326 = vsel %vm309, %v287, 0
      %v329 = vsel %vm309, %v288, 0
      %v332 = vsel %vm309, %v289, 0
      %v335 = vsel %vm309, %v290, 0
      %v338 = vsel %vm309, %v291, 0
      %v341 = vsel %vm309, %v292, 0
      %v344 = vsel %vm309, %v293, 0
      %v347 = vsel %vm309, %v294, 0
      %v350 = vsel %vm309, %v295, 0
      %v353 = vsel %vm309, %v296, 0
      %v356 = vsel %vm309, %v297, 0
      %358 = vmatprep.subr.mxu0 0.0
      %359 = vmatpush1.msra.mxu0 %v298
      %360 = vmatprep.subr.mxu0 0.0
      %361 = vmatpush1.msra.mxu0 %v299
      %362 = vmatprep.subr.mxu0 0.0
      %363 = vmatpush1.msra.mxu0 %v300
      %364 = vmatprep.subr.mxu0 0.0
      %365 = vmatpush1.msra.mxu0 %v301
      %366 = vmatprep.subr.mxu0 0.0
      %367 = vmatpush1.msra.mxu0 0.0
      %368 = vmatprep.subr.mxu0 0.0
      %369 = vmatpush1.msra.mxu0 0.0
      %370 = vmatprep.subr.mxu0 0.0
      %371 = vmatpush1.msra.mxu0 0.0
      %372 = vmatprep.subr.mxu0 0.0
      %373 = vmatpush1.msra.mxu0 0.0
      %374 = vmatprep.subr.mxu0 0.0
      %375 = vmatpush1.msra.mxu0 0.0
      %376 = vmatprep.subr.mxu0 0.0
      %377 = vmatpush1.msra.mxu0 0.0
      %378 = vmatprep.subr.mxu0 0.0
      %379 = vmatpush1.msra.mxu0 0.0
      %380 = vmatprep.subr.mxu0 0.0
      %381 = vmatpush1.msra.mxu0 0.0
      %382 = vmatprep.subr.mxu0 0.0
      %383 = vmatpush1.msra.mxu0 0.0
      %384 = vmatprep.subr.mxu0 0.0
      %385 = vmatpush1.msra.mxu0 0.0
      %386 = vmatprep.subr.mxu0 0.0
      %387 = vmatpush1.msra.mxu0 0.0
      %388 = vmatprep.subr.mxu0 0.0
      %389 = vmatpush1.msra.mxu0 0.0
      %390 = vmatprep.subr.mxu0 0.0
      %391 = vmatpush1.msra.mxu0 0.0
      %392 = vmatprep.subr.mxu0 0.0
      %393 = vmatpush1.msra.mxu0 0.0
      %394 = vmatprep.subr.mxu0 0.0
      %395 = vmatpush1.msra.mxu0 0.0
      %396 = vmatprep.subr.mxu0 0.0
      %397 = vmatpush1.msra.mxu0 0.0
      %398 = vmatprep.subr.mxu0 0.0
      %399 = vmatpush1.msra.mxu0 0.0
      %400 = vmatprep.subr.mxu0 0.0
      %401 = vmatpush1.msra.mxu0 0.0
      %402 = vmatprep.subr.mxu0 0.0
      %403 = vmatpush1.msra.mxu0 0.0
      %404 = vmatprep.subr.mxu0 0.0
      %405 = vmatpush1.msra.mxu0 0.0
      %406 = vmatprep.subr.mxu0 0.0
      %407 = vmatpush1.msra.mxu0 0.0
      %408 = vmatprep.subr.mxu0 0.0
      %409 = vmatpush1.msra.mxu0 0.0
      %410 = vmatprep.subr.mxu0 0.0
      %411 = vmatpush1.msra.mxu0 0.0
      %412 = vmatprep.subr.mxu0 0.0
      %413 = vmatpush1.msra.mxu0 0.0
      %414 = vmatprep.subr.mxu0 0.0
      %415 = vmatpush1.msra.mxu0 0.0
      %416 = vmatprep.subr.mxu0 0.0
      %417 = vmatpush1.msra.mxu0 0.0
      %418 = vmatprep.subr.mxu0 0.0
      %419 = vmatpush1.msra.mxu0 0.0
      %420 = vmatprep.subr.mxu0 0.0
      %421 = vmatpush1.msra.mxu0 0.0
      %422 = vmatprep.mubr.f32.mxu0 0.0
      %423 = vmatmul.mubr.f32.gmra.mrb[0].mxu0 %v311
      %v424 = vpop.f32.mrb[0].mxu0
      %v425 = vadd.f32 %v307, %v424
      %v426 = vpop.f32.mrb[0].mxu0
      %427 = vmatprep.mubr.f32.mxu0 0.0
      %428 = vmatmul.mubr.f32.gmra.mrb[0].mxu0 %v314
      %v429 = vpop.f32.mrb[0].mxu0
      %v430 = vadd.f32 %v307, %v429
      %v431 = vpop.f32.mrb[0].mxu0
      %432 = vmatprep.mubr.f32.mxu0 0.0
      %433 = vmatmul.mubr.f32.gmra.mrb[0].mxu0 %v317
      %v434 = vpop.f32.mrb[0].mxu0
      %v435 = vadd.f32 %v307, %v434
      %v436 = vpop.f32.mrb[0].mxu0
      %437 = vmatprep.mubr.f32.mxu0 0.0
      %438 = vmatmul.mubr.f32.gmra.mrb[0].mxu0 %v320
      %v439 = vpop.f32.mrb[0].mxu0
      %v440 = vadd.f32 %v307, %v439
      %v441 = vpop.f32.mrb[0].mxu0
      %442 = vmatprep.mubr.f32.mxu0 0.0
      %443 = vmatmul.mubr.f32.gmra.mrb[0].mxu0 %v323
      %v444 = vpop.f32.mrb[0].mxu0
      %v445 = vadd.f32 %v307, %v444
      %v446 = vpop.f32.mrb[0].mxu0
      %447 = vmatprep.mubr.f32.mxu0 0.0
      %448 = vmatmul.mubr.f32.gmra.mrb[0].mxu0 %v326
      %v449 = vpop.f32.mrb[0].mxu0
      %v450 = vadd.f32 %v307, %v449
      %v451 = vpop.f32.mrb[0].mxu0
      %452 = vmatprep.mubr.f32.mxu0 0.0
      %453 = vmatmul.mubr.f32.gmra.mrb[0].mxu0 %v329
      %v454 = vpop.f32.mrb[0].mxu0
      %v455 = vadd.f32 %v307, %v454
      %v456 = vpop.f32.mrb[0].mxu0
      %457 = vmatprep.mubr.f32.mxu0 0.0
      %458 = vmatmul.mubr.f32.gmra.mrb[0].mxu0 %v332
      %v459 = vpop.f32.mrb[0].mxu0
      %v460 = vadd.f32 %v307, %v459
      %v461 = vpop.f32.mrb[0].mxu0
      %462 = vmatprep.mubr.f32.mxu0 0.0
      %463 = vmatmul.mubr.f32.gmra.mrb[0].mxu0 %v335
      %v464 = vpop.f32.mrb[0].mxu0
      %v465 = vadd.f32 %v307, %v464
      %v466 = vpop.f32.mrb[0].mxu0
      %467 = vmatprep.mubr.f32.mxu0 0.0
      %468 = vmatmul.mubr.f32.gmra.mrb[0].mxu0 %v338
      %v469 = vpop.f32.mrb[0].mxu0
      %v470 = vadd.f32 %v307, %v469
      %v471 = vpop.f32.mrb[0].mxu0
      %472 = vmatprep.mubr.f32.mxu0 0.0
      %473 = vmatmul.mubr.f32.gmra.mrb[0].mxu0 %v341
      %v474 = vpop.f32.mrb[0].mxu0
      %v475 = vadd.f32 %v307, %v474
      %v476 = vpop.f32.mrb[0].mxu0
      %477 = vmatprep.mubr.f32.mxu0 0.0
      %478 = vmatmul.mubr.f32.gmra.mrb[0].mxu0 %v344
      %v479 = vpop.f32.mrb[0].mxu0
      %v480 = vadd.f32 %v307, %v479
      %v481 = vpop.f32.mrb[0].mxu0
      %482 = vmatprep.mubr.f32.mxu0 0.0
      %483 = vmatmul.mubr.f32.gmra.mrb[0].mxu0 %v347
      %v484 = vpop.f32.mrb[0].mxu0
      %v485 = vadd.f32 %v307, %v484
      %v486 = vpop.f32.mrb[0].mxu0
      %487 = vmatprep.mubr.f32.mxu0 0.0
      %488 = vmatmul.mubr.f32.gmra.mrb[0].mxu0 %v350
      %v489 = vpop.f32.mrb[0].mxu0
      %v490 = vadd.f32 %v307, %v489
      %v491 = vpop.f32.mrb[0].mxu0
      %492 = vmatprep.mubr.f32.mxu0 0.0
      %493 = vmatmul.mubr.f32.gmra.mrb[0].mxu0 %v353
      %v494 = vpop.f32.mrb[0].mxu0
      %v495 = vadd.f32 %v307, %v494
      %v496 = vpop.f32.mrb[0].mxu0
      %497 = vmatprep.mubr.f32.mxu0 0.0
      %498 = vmatmul.mubr.f32.gmra.mrb[0].mxu0 %v356
      %v499 = vpop.f32.mrb[0].mxu0
      %v500 = vadd.f32 %v307, %v499
      %v501 = vpop.f32.mrb[0].mxu0
      %502 = vdwg.mxu0
      %v503 = vmax.f32 %v425, 0.0
      %v504 = vmax.f32 %v430, 0.0
      %v505 = vmax.f32 %v435, 0.0
      %v506 = vmax.f32 %v440, 0.0
      %v507 = vmax.f32 %v445, 0.0
      %v508 = vmax.f32 %v450, 0.0
      %v509 = vmax.f32 %v455, 0.0
      %v510 = vmax.f32 %v460, 0.0
      %v511 = vmax.f32 %v465, 0.0
      %v512 = vmax.f32 %v470, 0.0
      %v513 = vmax.f32 %v475, 0.0
      %v514 = vmax.f32 %v480, 0.0
      %v515 = vmax.f32 %v485, 0.0
      %v516 = vmax.f32 %v490, 0.0
      %v517 = vmax.f32 %v495, 0.0
      %v518 = vmax.f32 %v500, 0.0
      %v519 = vld [vmem:[%s3] sm:$0xff]
      %v520 = vld [vmem:[%s3 + $0x8] sm:$0xff]
      %v521 = vld [vmem:[%s3 + $0x10] sm:$0xff]
      %v522 = vld [vmem:[%s3 + $0x18] sm:$0xff]
      %v523 = vld [vmem:[%s3 + $0x20] sm:$0xff]
      %v524 = vld [vmem:[%s3 + $0x28] sm:$0xff]
      %v525 = vld [vmem:[%s3 + $0x30] sm:$0xff]
      %v526 = vld [vmem:[%s3 + $0x38] sm:$0xff]
      %v527 = vld [vmem:[%s3 + $0x40] sm:$0xff]
      %v528 = vld [vmem:[%s3 + $0x48] sm:$0xff]
      %v529 = vld [vmem:[%s3 + $0x50] sm:$0xff]
      %v530 = vld [vmem:[%s3 + $0x58] sm:$0xff]
      %v531 = vld [vmem:[%s3 + $0x60] sm:$0xff]
      %v532 = vld [vmem:[%s3 + $0x68] sm:$0xff]
      %v533 = vld [vmem:[%s3 + $0x70] sm:$0xff]
      %v534 = vld [vmem:[%s3 + $0x78] sm:$0xff]
      %v535 = vld [vmem:[%s4] sm:$0x1]
      %v537 = vlaneseq
      %v538 = vshrl.u32 %v537, 7
      %v539 = vsub.s32 0, %v538
      %v540 = vrot.slane %v535, %v539
      %542 = vmatprep.subr.mxu0 0.0
      %543 = vmatpush1.msra.mxu0 %v519
      %544 = vmatprep.subr.mxu0 0.0
      %545 = vmatpush1.msra.mxu0 %v520
      %546 = vmatprep.subr.mxu0 0.0
      %547 = vmatpush1.msra.mxu0 %v521
      %548 = vmatprep.subr.mxu0 0.0
      %549 = vmatpush1.msra.mxu0 %v522
      %550 = vmatprep.subr.mxu0 0.0
      %551 = vmatpush1.msra.mxu0 %v523
      %552 = vmatprep.subr.mxu0 0.0
      %553 = vmatpush1.msra.mxu0 %v524
      %554 = vmatprep.subr.mxu0 0.0
      %555 = vmatpush1.msra.mxu0 %v525
      %556 = vmatprep.subr.mxu0 0.0
      %557 = vmatpush1.msra.mxu0 %v526
      %558 = vmatprep.subr.mxu0 0.0
      %559 = vmatpush1.msra.mxu0 %v527
      %560 = vmatprep.subr.mxu0 0.0
      %561 = vmatpush1.msra.mxu0 %v528
      %562 = vmatprep.subr.mxu0 0.0
      %563 = vmatpush1.msra.mxu0 %v529
      %564 = vmatprep.subr.mxu0 0.0
      %565 = vmatpush1.msra.mxu0 %v530
      %566 = vmatprep.subr.mxu0 0.0
      %567 = vmatpush1.msra.mxu0 %v531
      %568 = vmatprep.subr.mxu0 0.0
      %569 = vmatpush1.msra.mxu0 %v532
      %570 = vmatprep.subr.mxu0 0.0
      %571 = vmatpush1.msra.mxu0 %v533
      %572 = vmatprep.subr.mxu0 0.0
      %573 = vmatpush1.msra.mxu0 %v534
      %574 = vmatprep.subr.mxu0 0.0
      %575 = vmatpush1.msra.mxu0 0.0
      %576 = vmatprep.subr.mxu0 0.0
      %577 = vmatpush1.msra.mxu0 0.0
      %578 = vmatprep.subr.mxu0 0.0
      %579 = vmatpush1.msra.mxu0 0.0
      %580 = vmatprep.subr.mxu0 0.0
      %581 = vmatpush1.msra.mxu0 0.0
      %582 = vmatprep.subr.mxu0 0.0
      %583 = vmatpush1.msra.mxu0 0.0
      %584 = vmatprep.subr.mxu0 0.0
      %585 = vmatpush1.msra.mxu0 0.0
      %586 = vmatprep.subr.mxu0 0.0
      %587 = vmatpush1.msra.mxu0 0.0
      %588 = vmatprep.subr.mxu0 0.0
      %589 = vmatpush1.msra.mxu0 0.0
      %590 = vmatprep.subr.mxu0 0.0
      %591 = vmatpush1.msra.mxu0 0.0
      %592 = vmatprep.subr.mxu0 0.0
      %593 = vmatpush1.msra.mxu0 0.0
      %594 = vmatprep.subr.mxu0 0.0
      %595 = vmatpush1.msra.mxu0 0.0
      %596 = vmatprep.subr.mxu0 0.0
      %597 = vmatpush1.msra.mxu0 0.0
      %598 = vmatprep.subr.mxu0 0.0
      %599 = vmatpush1.msra.mxu0 0.0
      %600 = vmatprep.subr.mxu0 0.0
      %601 = vmatpush1.msra.mxu0 0.0
      %602 = vmatprep.subr.mxu0 0.0
      %603 = vmatpush1.msra.mxu0 0.0
      %604 = vmatprep.subr.mxu0 0.0
      %605 = vmatpush1.msra.mxu0 0.0
      %606 = vmatprep.mubr.f32.mxu0 0.0
      %607 = vmatmul.mubr.f32.gmra.mrb[0].mxu0 %v503
      %v608 = vpop.f32.mrb[0].mxu0
      %v609 = vadd.f32 %v540, %v608
      %v610 = vpop.f32.mrb[0].mxu0
      %611 = vmatprep.mubr.f32.mxu0 0.0
      %612 = vmatmul.mubr.f32.gmra.mrb[0].mxu0 %v504
      %v613 = vpop.f32.mrb[0].mxu0
      %v614 = vadd.f32 %v540, %v613
      %v615 = vpop.f32.mrb[0].mxu0
      %616 = vmatprep.mubr.f32.mxu0 0.0
      %617 = vmatmul.mubr.f32.gmra.mrb[0].mxu0 %v505
      %v618 = vpop.f32.mrb[0].mxu0
      %v619 = vadd.f32 %v540, %v618
      %v620 = vpop.f32.mrb[0].mxu0
      %621 = vmatprep.mubr.f32.mxu0 0.0
      %622 = vmatmul.mubr.f32.gmra.mrb[0].mxu0 %v506
      %v623 = vpop.f32.mrb[0].mxu0
      %v624 = vadd.f32 %v540, %v623
      %v625 = vpop.f32.mrb[0].mxu0
      %626 = vmatprep.mubr.f32.mxu0 0.0
      %627 = vmatmul.mubr.f32.gmra.mrb[0].mxu0 %v507
      %v628 = vpop.f32.mrb[0].mxu0
      %v629 = vadd.f32 %v540, %v628
      %v630 = vpop.f32.mrb[0].mxu0
      %631 = vmatprep.mubr.f32.mxu0 0.0
      %632 = vmatmul.mubr.f32.gmra.mrb[0].mxu0 %v508
      %v633 = vpop.f32.mrb[0].mxu0
      %v634 = vadd.f32 %v540, %v633
      %v635 = vpop.f32.mrb[0].mxu0
      %636 = vmatprep.mubr.f32.mxu0 0.0
      %637 = vmatmul.mubr.f32.gmra.mrb[0].mxu0 %v509
      %v638 = vpop.f32.mrb[0].mxu0
      %v639 = vadd.f32 %v540, %v638
      %v640 = vpop.f32.mrb[0].mxu0
      %641 = vmatprep.mubr.f32.mxu0 0.0
      %642 = vmatmul.mubr.f32.gmra.mrb[0].mxu0 %v510
      %v643 = vpop.f32.mrb[0].mxu0
      %v644 = vadd.f32 %v540, %v643
      %v645 = vpop.f32.mrb[0].mxu0
      %646 = vmatprep.mubr.f32.mxu0 0.0
      %647 = vmatmul.mubr.f32.gmra.mrb[0].mxu0 %v511
      %v648 = vpop.f32.mrb[0].mxu0
      %v649 = vadd.f32 %v540, %v648
      %v650 = vpop.f32.mrb[0].mxu0
      %651 = vmatprep.mubr.f32.mxu0 0.0
      %652 = vmatmul.mubr.f32.gmra.mrb[0].mxu0 %v512
      %v653 = vpop.f32.mrb[0].mxu0
      %v654 = vadd.f32 %v540, %v653
      %v655 = vpop.f32.mrb[0].mxu0
      %656 = vmatprep.mubr.f32.mxu0 0.0
      %657 = vmatmul.mubr.f32.gmra.mrb[0].mxu0 %v513
      %v658 = vpop.f32.mrb[0].mxu0
      %v659 = vadd.f32 %v540, %v658
      %v660 = vpop.f32.mrb[0].mxu0
      %661 = vmatprep.mubr.f32.mxu0 0.0
      %662 = vmatmul.mubr.f32.gmra.mrb[0].mxu0 %v514
      %v663 = vpop.f32.mrb[0].mxu0
      %v664 = vadd.f32 %v540, %v663
      %v665 = vpop.f32.mrb[0].mxu0
      %666 = vmatprep.mubr.f32.mxu0 0.0
      %667 = vmatmul.mubr.f32.gmra.mrb[0].mxu0 %v515
      %v668 = vpop.f32.mrb[0].mxu0
      %v669 = vadd.f32 %v540, %v668
      %v670 = vpop.f32.mrb[0].mxu0
      %671 = vmatprep.mubr.f32.mxu0 0.0
      %672 = vmatmul.mubr.f32.gmra.mrb[0].mxu0 %v516
      %v673 = vpop.f32.mrb[0].mxu0
      %v674 = vadd.f32 %v540, %v673
      %v675 = vpop.f32.mrb[0].mxu0
      %676 = vmatprep.mubr.f32.mxu0 0.0
      %677 = vmatmul.mubr.f32.gmra.mrb[0].mxu0 %v517
      %v678 = vpop.f32.mrb[0].mxu0
      %v679 = vadd.f32 %v540, %v678
      %v680 = vpop.f32.mrb[0].mxu0
      %681 = vmatprep.mubr.f32.mxu0 0.0
      %682 = vmatmul.mubr.f32.gmra.mrb[0].mxu0 %v518
      %v683 = vpop.f32.mrb[0].mxu0
      %v684 = vadd.f32 %v540, %v683
      %v685 = vpop.f32.mrb[0].mxu0
      %686 = vdwg.mxu0
      %v687 = vmax.f32 %v609, 0.0
      %v688 = vmax.f32 %v614, 0.0
      %v689 = vmax.f32 %v619, 0.0
      %v690 = vmax.f32 %v624, 0.0
      %v691 = vmax.f32 %v629, 0.0
      %v692 = vmax.f32 %v634, 0.0
      %v693 = vmax.f32 %v639, 0.0
      %v694 = vmax.f32 %v644, 0.0
      %v695 = vmax.f32 %v649, 0.0
      %v696 = vmax.f32 %v654, 0.0
      %v697 = vmax.f32 %v659, 0.0
      %v698 = vmax.f32 %v664, 0.0
      %v699 = vmax.f32 %v669, 0.0
      %v700 = vmax.f32 %v674, 0.0
      %v701 = vmax.f32 %v679, 0.0
      %v702 = vmax.f32 %v684, 0.0
      %v703 = vld [vmem:[%s5] sm:$0xff]
      %v704 = vld [vmem:[%s5 + $0x8] sm:$0xff]
      %v705 = vld [vmem:[%s5 + $0x10] sm:$0xff]
      %v706 = vld [vmem:[%s5 + $0x18] sm:$0xff]
      %v707 = vld [vmem:[%s5 + $0x20] sm:$0xff]
      %v708 = vld [vmem:[%s5 + $0x28] sm:$0xff]
      %v709 = vld [vmem:[%s5 + $0x30] sm:$0xff]
      %v710 = vld [vmem:[%s5 + $0x38] sm:$0xff]
      %v711 = vld [vmem:[%s5 + $0x40] sm:$0xff]
      %v712 = vld [vmem:[%s5 + $0x48] sm:$0xff]
      %v713 = vld [vmem:[%s5 + $0x50] sm:$0xff]
      %v714 = vld [vmem:[%s5 + $0x58] sm:$0xff]
      %v715 = vld [vmem:[%s5 + $0x60] sm:$0xff]
      %v716 = vld [vmem:[%s5 + $0x68] sm:$0xff]
      %v717 = vld [vmem:[%s5 + $0x70] sm:$0xff]
      %v718 = vld [vmem:[%s5 + $0x78] sm:$0xff]
      %v719 = vld [vmem:[%s6] sm:$0x1]
      %v721 = vlaneseq
      %v722 = vshrl.u32 %v721, 7
      %v723 = vsub.s32 0, %v722
      %v724 = vrot.slane %v719, %v723
      %726 = vmatprep.subr.mxu0 0.0
      %727 = vmatpush1.msra.mxu0 %v703
      %728 = vmatprep.subr.mxu0 0.0
      %729 = vmatpush1.msra.mxu0 %v704
      %730 = vmatprep.subr.mxu0 0.0
      %731 = vmatpush1.msra.mxu0 %v705
      %732 = vmatprep.subr.mxu0 0.0
      %733 = vmatpush1.msra.mxu0 %v706
      %734 = vmatprep.subr.mxu0 0.0
      %735 = vmatpush1.msra.mxu0 %v707
      %736 = vmatprep.subr.mxu0 0.0
      %737 = vmatpush1.msra.mxu0 %v708
      %738 = vmatprep.subr.mxu0 0.0
      %739 = vmatpush1.msra.mxu0 %v709
      %740 = vmatprep.subr.mxu0 0.0
      %741 = vmatpush1.msra.mxu0 %v710
      %742 = vmatprep.subr.mxu0 0.0
      %743 = vmatpush1.msra.mxu0 %v711
      %744 = vmatprep.subr.mxu0 0.0
      %745 = vmatpush1.msra.mxu0 %v712
      %746 = vmatprep.subr.mxu0 0.0
      %747 = vmatpush1.msra.mxu0 %v713
      %748 = vmatprep.subr.mxu0 0.0
      %749 = vmatpush1.msra.mxu0 %v714
      %750 = vmatprep.subr.mxu0 0.0
      %751 = vmatpush1.msra.mxu0 %v715
      %752 = vmatprep.subr.mxu0 0.0
      %753 = vmatpush1.msra.mxu0 %v716
      %754 = vmatprep.subr.mxu0 0.0
      %755 = vmatpush1.msra.mxu0 %v717
      %756 = vmatprep.subr.mxu0 0.0
      %757 = vmatpush1.msra.mxu0 %v718
      %758 = vmatprep.subr.mxu0 0.0
      %759 = vmatpush1.msra.mxu0 0.0
      %760 = vmatprep.subr.mxu0 0.0
      %761 = vmatpush1.msra.mxu0 0.0
      %762 = vmatprep.subr.mxu0 0.0
      %763 = vmatpush1.msra.mxu0 0.0
      %764 = vmatprep.subr.mxu0 0.0
      %765 = vmatpush1.msra.mxu0 0.0
      %766 = vmatprep.subr.mxu0 0.0
      %767 = vmatpush1.msra.mxu0 0.0
      %768 = vmatprep.subr.mxu0 0.0
      %769 = vmatpush1.msra.mxu0 0.0
      %770 = vmatprep.subr.mxu0 0.0
      %771 = vmatpush1.msra.mxu0 0.0
      %772 = vmatprep.subr.mxu0 0.0
      %773 = vmatpush1.msra.mxu0 0.0
      %774 = vmatprep.subr.mxu0 0.0
      %775 = vmatpush1.msra.mxu0 0.0
      %776 = vmatprep.subr.mxu0 0.0
      %777 = vmatpush1.msra.mxu0 0.0
      %778 = vmatprep.subr.mxu0 0.0
      %779 = vmatpush1.msra.mxu0 0.0
      %780 = vmatprep.subr.mxu0 0.0
      %781 = vmatpush1.msra.mxu0 0.0
      %782 = vmatprep.subr.mxu0 0.0
      %783 = vmatpush1.msra.mxu0 0.0
      %784 = vmatprep.subr.mxu0 0.0
      %785 = vmatpush1.msra.mxu0 0.0
      %786 = vmatprep.subr.mxu0 0.0
      %787 = vmatpush1.msra.mxu0 0.0
      %788 = vmatprep.subr.mxu0 0.0
      %789 = vmatpush1.msra.mxu0 0.0
      %790 = vmatprep.mubr.f32.mxu0 0.0
      %791 = vmatmul.mubr.f32.gmra.mrb[0].mxu0 %v687
      %v792 = vpop.f32.mrb[0].mxu0
      %v793 = vadd.f32 %v724, %v792
      %v794 = vpop.f32.mrb[0].mxu0
      %795 = vmatprep.mubr.f32.mxu0 0.0
      %796 = vmatmul.mubr.f32.gmra.mrb[0].mxu0 %v688
      %v797 = vpop.f32.mrb[0].mxu0
      %v798 = vadd.f32 %v724, %v797
      %v799 = vpop.f32.mrb[0].mxu0
      %800 = vmatprep.mubr.f32.mxu0 0.0
      %801 = vmatmul.mubr.f32.gmra.mrb[0].mxu0 %v689
      %v802 = vpop.f32.mrb[0].mxu0
      %v803 = vadd.f32 %v724, %v802
      %v804 = vpop.f32.mrb[0].mxu0
      %805 = vmatprep.mubr.f32.mxu0 0.0
      %806 = vmatmul.mubr.f32.gmra.mrb[0].mxu0 %v690
      %v807 = vpop.f32.mrb[0].mxu0
      %v808 = vadd.f32 %v724, %v807
      %v809 = vpop.f32.mrb[0].mxu0
      %810 = vmatprep.mubr.f32.mxu0 0.0
      %811 = vmatmul.mubr.f32.gmra.mrb[0].mxu0 %v691
      %v812 = vpop.f32.mrb[0].mxu0
      %v813 = vadd.f32 %v724, %v812
      %v814 = vpop.f32.mrb[0].mxu0
      %815 = vmatprep.mubr.f32.mxu0 0.0
      %816 = vmatmul.mubr.f32.gmra.mrb[0].mxu0 %v692
      %v817 = vpop.f32.mrb[0].mxu0
      %v818 = vadd.f32 %v724, %v817
      %v819 = vpop.f32.mrb[0].mxu0
      %820 = vmatprep.mubr.f32.mxu0 0.0
      %821 = vmatmul.mubr.f32.gmra.mrb[0].mxu0 %v693
      %v822 = vpop.f32.mrb[0].mxu0
      %v823 = vadd.f32 %v724, %v822
      %v824 = vpop.f32.mrb[0].mxu0
      %825 = vmatprep.mubr.f32.mxu0 0.0
      %826 = vmatmul.mubr.f32.gmra.mrb[0].mxu0 %v694
      %v827 = vpop.f32.mrb[0].mxu0
      %v828 = vadd.f32 %v724, %v827
      %v829 = vpop.f32.mrb[0].mxu0
      %830 = vmatprep.mubr.f32.mxu0 0.0
      %831 = vmatmul.mubr.f32.gmra.mrb[0].mxu0 %v695
      %v832 = vpop.f32.mrb[0].mxu0
      %v833 = vadd.f32 %v724, %v832
      %v834 = vpop.f32.mrb[0].mxu0
      %835 = vmatprep.mubr.f32.mxu0 0.0
      %836 = vmatmul.mubr.f32.gmra.mrb[0].mxu0 %v696
      %v837 = vpop.f32.mrb[0].mxu0
      %v838 = vadd.f32 %v724, %v837
      %v839 = vpop.f32.mrb[0].mxu0
      %840 = vmatprep.mubr.f32.mxu0 0.0
      %841 = vmatmul.mubr.f32.gmra.mrb[0].mxu0 %v697
      %v842 = vpop.f32.mrb[0].mxu0
      %v843 = vadd.f32 %v724, %v842
      %v844 = vpop.f32.mrb[0].mxu0
      %845 = vmatprep.mubr.f32.mxu0 0.0
      %846 = vmatmul.mubr.f32.gmra.mrb[0].mxu0 %v698
      %v847 = vpop.f32.mrb[0].mxu0
      %v848 = vadd.f32 %v724, %v847
      %v849 = vpop.f32.mrb[0].mxu0
      %850 = vmatprep.mubr.f32.mxu0 0.0
      %851 = vmatmul.mubr.f32.gmra.mrb[0].mxu0 %v699
      %v852 = vpop.f32.mrb[0].mxu0
      %v853 = vadd.f32 %v724, %v852
      %v854 = vpop.f32.mrb[0].mxu0
      %855 = vmatprep.mubr.f32.mxu0 0.0
      %856 = vmatmul.mubr.f32.gmra.mrb[0].mxu0 %v700
      %v857 = vpop.f32.mrb[0].mxu0
      %v858 = vadd.f32 %v724, %v857
      %v859 = vpop.f32.mrb[0].mxu0
      %860 = vmatprep.mubr.f32.mxu0 0.0
      %861 = vmatmul.mubr.f32.gmra.mrb[0].mxu0 %v701
      %v862 = vpop.f32.mrb[0].mxu0
      %v863 = vadd.f32 %v724, %v862
      %v864 = vpop.f32.mrb[0].mxu0
      %865 = vmatprep.mubr.f32.mxu0 0.0
      %866 = vmatmul.mubr.f32.gmra.mrb[0].mxu0 %v702
      %v867 = vpop.f32.mrb[0].mxu0
      %v868 = vadd.f32 %v724, %v867
      %v869 = vpop.f32.mrb[0].mxu0
      %870 = vdwg.mxu0
      %vm871 = vcmask 130048
      %872 = vst.msk [vmem:[%s280] sm:$0xff] %vm871, %v793
      %873 = vst.msk [vmem:[%s280 + $0x8] sm:$0xff] %vm871, %v798
      %874 = vst.msk [vmem:[%s280 + $0x10] sm:$0xff] %vm871, %v803
      %875 = vst.msk [vmem:[%s280 + $0x18] sm:$0xff] %vm871, %v808
      %876 = vst.msk [vmem:[%s280 + $0x20] sm:$0xff] %vm871, %v813
      %877 = vst.msk [vmem:[%s280 + $0x28] sm:$0xff] %vm871, %v818
      %878 = vst.msk [vmem:[%s280 + $0x30] sm:$0xff] %vm871, %v823
      %879 = vst.msk [vmem:[%s280 + $0x38] sm:$0xff] %vm871, %v828
      %880 = vst.msk [vmem:[%s280 + $0x40] sm:$0xff] %vm871, %v833
      %881 = vst.msk [vmem:[%s280 + $0x48] sm:$0xff] %vm871, %v838
      %882 = vst.msk [vmem:[%s280 + $0x50] sm:$0xff] %vm871, %v843
      %883 = vst.msk [vmem:[%s280 + $0x58] sm:$0xff] %vm871, %v848
      %884 = vst.msk [vmem:[%s280 + $0x60] sm:$0xff] %vm871, %v853
      %885 = vst.msk [vmem:[%s280 + $0x68] sm:$0xff] %vm871, %v858
      %886 = vst.msk [vmem:[%s280 + $0x70] sm:$0xff] %vm871, %v863
      %887 = vst.msk [vmem:[%s280 + $0x78] sm:$0xff] %vm871, %v868
      %s888 = smul.u32 16, %s18
      %p889 = scmp.lt.s32.totalorder %s888, 31
      %s890 = scalar_select %p889, %s888, 31
      %s891 = smul.addr %s890, 8
      %s892 = scalar_lea.vmem %s7, %s891
      // Predicated region
      $region49: #{tpu_custom_call.1} parent=47 // pred_check
        %p893 = pneg %p188
      $region50: #{tpu_custom_call.1} parent=47 // pred_check_branch
        %895 = sbr.rel (%p893) target = $region52
      $region51: #{tpu_custom_call.1} parent=47 // pred_region
        %s896 = smul.u32 16, %s18
      $region52: #{tpu_custom_call.1} parent=47 // pred_fallthru
        _
    $region48: #{tpu_custom_call.1} parent=5 // pred_fallthru
      _
    %p897 = scmp.le.s32.totalorder 2, %s13
    // Predicated region
    $region53: #{tpu_custom_call.1} parent=5 // pred_check
      %p898 = pneg %p897
    $region54: #{tpu_custom_call.1} parent=5 // pred_check_branch
      %900 = sbr.rel (%p898) target = $region56
    $region55: #{tpu_custom_call.1} parent=5 // pred_region
      %s901 = ssub.s32 %s13, 2
      // Predicated region
      $region57: #{tpu_custom_call.1} parent=55 // pred_check
        %p902 = pneg %p194
      $region58: #{tpu_custom_call.1} parent=55 // pred_check_branch
        %904 = sbr.rel (%p902) target = $region60
      $region59: #{tpu_custom_call.1} parent=55 // pred_region
        %s905 = smul.u32 16, %s19
        %p906 = scmp.lt.s32.totalorder %s905, 31
        %s907 = scalar_select %p906, %s905, 31
        %s908 = smul.addr %s907, 8
        %s909 = scalar_lea.vmem %s7, %s908
      $region60: #{tpu_custom_call.1} parent=55 // pred_fallthru
        _
    $region56: #{tpu_custom_call.1} parent=5 // pred_fallthru
      _
  $region6: #{tpu_custom_call.1} parent=0 // loop_footer
    %s17 = sadd.s32 1, %s13
  $region7: #{tpu_custom_call.1} parent=0 // loop_footer_branch
    %12 = sbr.rel target = $region3
  $region8: #{tpu_custom_call.1} parent=0 // loop_exit
    _

</llo_original>
